<compile_context>
chip_gen: v7x
topology: tpu7x:2x2x1
jax: 0.10.0
libtpu: 0.0.40
codegen_flags: <defaults>
</compile_context>

<pallas_src>
import numpy as np

import jax
import jax.numpy as jnp
from jax.experimental import pallas as pl
from jax.experimental.pallas import tpu as pltpu

# ----------------------------- model hyperparams -----------------------------
INPUT_SIZE = 16        # L
HIDDEN     = 32        # H
CNN_LAYERS = 2
LSTM_LAYERS = 2
OUTPUT     = 8         # O
KSIZE, STRIDE, PAD = 3, 1, 1
BATCH      = 4         # B  (== LSTM sequence length, PyTorch 2-D LSTM quirk)
FEAT       = HIDDEN * INPUT_SIZE   # H*L, LSTM layer-0 input size


# ------------------------------ fused kernel ----------------------------------
def _fused_kernel(taps_ref, mask_ref, w0b_ref, b0t_ref, w1s_ref, b1_ref,
                  wih0_ref, bias0_ref, whh0_ref, wih1_ref, whh1_ref, bias1_ref,
                  wfc_ref, bfc_ref, out_ref, feat_ref):
    f32, bf16 = jnp.float32, jnp.bfloat16
    B = out_ref.shape[0]                    # batch == LSTM sequence length
    H = w1s_ref.shape[1]                    # hidden size
    L = taps_ref.shape[0] // B              # conv length (rows ordered (l, b))

    # ---- conv layer 0 and its +/-1 shifted copies: ONE banded matmul ---------
    # taps[(l,b), r] = x[b, l + r - 2] (0 if OOB); w0band emits columns
    # [shift -1 | shift 0 | shift +1], each a full conv-0 output block.
    pre = jnp.dot(taps_ref[...].astype(bf16), w0b_ref[...],
                  preferred_element_type=f32)                       # (L*B, 3H)
    a96 = jnp.maximum(pre + b0t_ref[...], 0.0) * mask_ref[...]      # zero-pad mask

    # ---- conv layer 1 + ReLU: ONE matmul over the lane-stacked taps ----------
    y = jnp.maximum(jnp.dot(a96.astype(bf16), w1s_ref[...],
                            preferred_element_type=f32) + b1_ref[...], 0.0)  # (L*B, H)

    # ---- relayout (l, b, h) -> feats[b, l*H + h] via VMEM scratch ------------
    # 16 static contiguous sublane slices -> static lane-window stores.
    for l in range(L):
        feat_ref[:, l * H:(l + 1) * H] = y[l * B:(l + 1) * B, :]
    feats = feat_ref[...]                                            # (B, L*H)

    # ---- LSTM layer-0 input projection: one lane-dense (B,512)@(512,4H) ------
    proj0 = (jnp.dot(feats.astype(bf16), wih0_ref[...],
                     preferred_element_type=f32) + bias0_ref[...])   # (B, 4H)

    whh0 = whh0_ref[...]
    wih1 = wih1_ref[...]
    whh1 = whh1_ref[...]
    bias1 = bias1_ref[...]

    def cell(gates, c_prev):
        # full-width transcendentals (EUP slot), then cheap lane slices
        sig = jax.nn.sigmoid(gates)
        th = jnp.tanh(gates)
        i_g = sig[:, 0 * H:1 * H]
        f_g = sig[:, 1 * H:2 * H]
        g_g = th[:, 2 * H:3 * H]
        o_g = sig[:, 3 * H:4 * H]
        c_new = f_g * c_prev + i_g * g_g
        return o_g * jnp.tanh(c_new), c_new

    h0 = jnp.zeros((1, H), f32)
    c0 = jnp.zeros((1, H), f32)
    h1 = jnp.zeros((1, H), f32)
    c1 = jnp.zeros((1, H), f32)
    row_ids = jax.lax.broadcasted_iota(jnp.int32, (B, 1), 0)
    hs = jnp.zeros((B, H), f32)             # top-layer h_t, kept in vregs
    for t in range(B):                      # static unroll, B == seq length
        # layer-1 recurrent term only depends on last step -> off critical path
        r1 = jnp.dot(h1.astype(bf16), whh1, preferred_element_type=f32) + bias1
        g0 = proj0[t:t + 1, :] + jnp.dot(h0.astype(bf16), whh0,
                                         preferred_element_type=f32)
        h0, c0 = cell(g0, c0)
        g1 = jnp.dot(h0.astype(bf16), wih1, preferred_element_type=f32) + r1
        h1, c1 = cell(g1, c1)
        hs = hs + (row_ids == t).astype(f32) * h1      # place h1 into row t

    # ---- batched FC over all timesteps, single output store ------------------
    out_ref[...] = (jnp.dot(hs.astype(bf16), wfc_ref[...],
                            preferred_element_type=f32) + bfc_ref[...])


# ------------------------------ param packing (once) --------------------------
def pack_params(params):
    """One-time packing: banded conv-0 weight (emits shift -1/0/+1 blocks),
    vertically stacked conv-1 weight, boundary masks, LSTM weights transposed
    and permuted to the kernel's (l, h) feature order, biases folded, all MXU
    operands cast to bf16."""
    (w0, b0), (w1, b1) = params["convs"]
    (wih0, whh0, bih0, bhh0), (wih1, whh1, bih1, bhh1) = params["lstm"]
    w0 = np.asarray(w0, np.float32)
    w1 = np.asarray(w1, np.float32)
    H = w0.shape[0]
    K = w0.shape[2]
    L, B = INPUT_SIZE, BATCH
    G = 4 * H
    n = L * B

    # conv-0 banded weight: column block j (output shift j-1) uses tap k at row j+k.
    w0band = np.zeros((K + 2, 3 * H), np.float32)
    for j in range(3):
        for k in range(K):
            w0band[j + k, j * H:(j + 1) * H] = w0[:, 0, k]
    b0t = np.tile(np.asarray(b0, np.float32).reshape(1, H), (1, 3))

    # zero-padding boundary mask, rows ordered (l, b)
    mask = np.ones((n, 3 * H), np.float32)
    for b in range(B):
        mask[0 * B + b, 0:H] = 0.0                    # shift -1 invalid at l == 0
        mask[(L - 1) * B + b, 2 * H:3 * H] = 0.0      # shift +1 invalid at l == L-1

    # conv-1 weight stacked over taps: row k*H + h_in -> w1[h_out, h_in, k]
    w1s = np.transpose(w1, (2, 1, 0)).reshape(3 * H, H)

    # LSTM layer-0 input weight permuted to feats[b, l*H + h] ordering
    wih0p = (np.asarray(wih0, np.float32).reshape(G, H, L)
             .transpose(2, 1, 0).reshape(L * H, G))

    packed = {
        "mask96": jnp.asarray(mask, jnp.float32),
        "w0band": jnp.asarray(w0band, jnp.bfloat16),
        "b0t":    jnp.asarray(b0t, jnp.float32),
        "w1s":    jnp.asarray(w1s, jnp.bfloat16),
        "b1":     jnp.asarray(np.asarray(b1, np.float32).reshape(1, H), jnp.float32),
        "wih0":   jnp.asarray(wih0p, jnp.bfloat16),
        "bias0":  jnp.asarray((np.asarray(bih0, np.float32)
                               + np.asarray(bhh0, np.float32)).reshape(1, G), jnp.float32),
        "whh0":   jnp.asarray(np.asarray(whh0, np.float32).T, jnp.bfloat16),
        "wih1":   jnp.asarray(np.asarray(wih1, np.float32).T, jnp.bfloat16),
        "whh1":   jnp.asarray(np.asarray(whh1, np.float32).T, jnp.bfloat16),
        "bias1":  jnp.asarray((np.asarray(bih1, np.float32)
                               + np.asarray(bhh1, np.float32)).reshape(1, G), jnp.float32),
        "wfc":    jnp.asarray(np.asarray(params["wfc"], np.float32).T, jnp.bfloat16),
        "bfc":    jnp.asarray(np.asarray(params["bfc"], np.float32).reshape(1, OUTPUT),
                              jnp.float32),
    }
    return packed


# ------------------------------ forward (hot path) ----------------------------
@jax.jit
def cnn_lstm_forward(x, packed):
    B, L = x.shape
    # 5-tap matrix of x, rows ordered (l, b): taps[(l,b), r] = x[b, l + r - 2]
    xt = jnp.pad(x.T, ((2, 2), (0, 0)))                              # (L+4, B)
    taps = jnp.stack([xt[r:r + L, :] for r in range(5)], axis=-1)    # (L, B, 5)
    taps = taps.reshape(L * B, 5)
    return pl.pallas_call(
        _fused_kernel,
        out_shape=jax.ShapeDtypeStruct((B, OUTPUT), jnp.float32),
        scratch_shapes=[pltpu.VMEM((B, L * HIDDEN), jnp.float32)],
    )(taps, packed["mask96"], packed["w0band"], packed["b0t"], packed["w1s"],
      packed["b1"], packed["wih0"], packed["bias0"], packed["whh0"],
      packed["wih1"], packed["whh1"], packed["bias1"],
      packed["wfc"], packed["bfc"])


# ------------------------------ reference (plain JAX, f32) --------------------
def ref_forward(x, params):
    h = x[:, None, :]
    for (w, b) in params["convs"]:
        xp = jnp.pad(h, ((0, 0), (0, 0), (PAD, PAD)))
        L = h.shape[2]
        acc = sum(jnp.einsum("oi,bil->bol", w[:, :, k], xp[:, :, k:k + L])
                  for k in range(w.shape[2]))
        h = jnp.maximum(acc + b[None, :, None], 0.0)
    feats = h.reshape(h.shape[0], -1)
    B = feats.shape[0]
    H = HIDDEN
    hs = [jnp.zeros((H,)) for _ in range(LSTM_LAYERS)]
    cs = [jnp.zeros((H,)) for _ in range(LSTM_LAYERS)]
    outs = []
    for t in range(B):
        xin = feats[t]
        for l, (wih, whh, bih, bhh) in enumerate(params["lstm"]):
            g = wih @ xin + whh @ hs[l] + bih + bhh
            i = jax.nn.sigmoid(g[0:H]); f = jax.nn.sigmoid(g[H:2 * H])
            gg = jnp.tanh(g[2 * H:3 * H]); o = jax.nn.sigmoid(g[3 * H:4 * H])
            cs[l] = f * cs[l] + i * gg
            hs[l] = o * jnp.tanh(cs[l])
            xin = hs[l]
        outs.append(params["wfc"] @ xin + params["bfc"])
    return jnp.stack(outs)


# ------------------------------ param init ------------------------------------
def init_params(key):
    ks = jax.random.split(key, 32)
    ki = iter(ks)
    params = {"convs": [], "lstm": []}
    cin = 1
    for _ in range(CNN_LAYERS):
        bound = 1.0 / (cin * KSIZE) ** 0.5
        w = jax.random.uniform(next(ki), (HIDDEN, cin, KSIZE), jnp.float32, -bound, bound)
        b = jax.random.uniform(next(ki), (HIDDEN,), jnp.float32, -bound, bound)
        params["convs"].append((w, b))
        cin = HIDDEN
    fin = FEAT
    for _ in range(LSTM_LAYERS):
        bound = 1.0 / HIDDEN ** 0.5
        wih = jax.random.uniform(next(ki), (4 * HIDDEN, fin), jnp.float32, -bound, bound)
        whh = jax.random.uniform(next(ki), (4 * HIDDEN, HIDDEN), jnp.float32, -bound, bound)
        bih = jax.random.uniform(next(ki), (4 * HIDDEN,), jnp.float32, -bound, bound)
        bhh = jax.random.uniform(next(ki), (4 * HIDDEN,), jnp.float32, -bound, bound)
        params["lstm"].append((wih, whh, bih, bhh))
        fin = HIDDEN
    bound = 1.0 / HIDDEN ** 0.5
    params["wfc"] = jax.random.uniform(next(ki), (OUTPUT, HIDDEN), jnp.float32, -bound, bound)
    params["bfc"] = jax.random.uniform(next(ki), (OUTPUT,), jnp.float32, -bound, bound)
    return params


if __name__ == "__main__":
    key = jax.random.PRNGKey(0)
    kx, kp = jax.random.split(key)
    x = jax.random.normal(kx, (BATCH, INPUT_SIZE), jnp.float32)
    params = init_params(kp)
    packed = pack_params(params)            # one-time packing, off the hot path

    out = jax.block_until_ready(cnn_lstm_forward(x, packed))
    ref = jax.block_until_ready(ref_forward(x, params))

    assert out.shape == (BATCH, OUTPUT), out.shape
    err = float(jnp.max(jnp.abs(out - ref)))
    # bf16 MXU operands (per review): tolerance loosened accordingly vs f32 ref.
    assert jnp.allclose(out, ref, rtol=3e-2, atol=3e-2), f"max abs diff {err}"
    print("KERNEL_OK")
</pallas_src>

<mosaic_0001>
module attributes {stable_mosaic.version = 11 : i64} {
  func.func @_fused_kernel(%arg0: memref<64x5xf32, #tpu.memory_space<vmem>>, %arg1: memref<64x96xf32, #tpu.memory_space<vmem>>, %arg2: memref<5x96xbf16, #tpu.memory_space<vmem>>, %arg3: memref<1x96xf32, #tpu.memory_space<vmem>>, %arg4: memref<96x32xbf16, #tpu.memory_space<vmem>>, %arg5: memref<1x32xf32, #tpu.memory_space<vmem>>, %arg6: memref<512x128xbf16, #tpu.memory_space<vmem>>, %arg7: memref<1x128xf32, #tpu.memory_space<vmem>>, %arg8: memref<32x128xbf16, #tpu.memory_space<vmem>>, %arg9: memref<32x128xbf16, #tpu.memory_space<vmem>>, %arg10: memref<32x128xbf16, #tpu.memory_space<vmem>>, %arg11: memref<1x128xf32, #tpu.memory_space<vmem>>, %arg12: memref<32x8xbf16, #tpu.memory_space<vmem>>, %arg13: memref<1x8xf32, #tpu.memory_space<vmem>>, %arg14: memref<4x8xf32, #tpu.memory_space<vmem>>, %arg15: memref<4x512xf32, #tpu.memory_space<vmem>>) attributes {dimension_semantics = [], scalar_prefetch = 0 : i64, scratch_operands = 1 : i64, tpu.core_type = #tpu.core_type<tc>} {
    %c0 = arith.constant 0 : index
    %c0_0 = arith.constant 0 : index
    %0 = vector.load %arg0[%c0, %c0_0] : memref<64x5xf32, #tpu.memory_space<vmem>>, vector<64x5xf32>
    %1 = arith.truncf %0 : vector<64x5xf32> to vector<64x5xbf16>
    %c0_1 = arith.constant 0 : index
    %c0_2 = arith.constant 0 : index
    %2 = vector.load %arg2[%c0_1, %c0_2] : memref<5x96xbf16, #tpu.memory_space<vmem>>, vector<5x96xbf16>
    %cst = arith.constant dense<0.000000e+00> : vector<64x96xf32>
    %3 = tpu.matmul %1, %2, %cst {dimension_numbers = #tpu.dot_dimension_numbers<[1], [0], [0], [1], [0, 0, 1, 1], [], []>} : vector<64x5xbf16>, vector<5x96xbf16>, vector<64x96xf32> -> vector<64x96xf32>
    %c0_3 = arith.constant 0 : index
    %c0_4 = arith.constant 0 : index
    %4 = vector.load %arg3[%c0_3, %c0_4] : memref<1x96xf32, #tpu.memory_space<vmem>>, vector<1x96xf32>
    %5 = vector.broadcast %4 : vector<1x96xf32> to vector<64x96xf32>
    %6 = arith.addf %3, %5 : vector<64x96xf32>
    %cst_5 = arith.constant 0.000000e+00 : f32
    %7 = vector.broadcast %cst_5 : f32 to vector<64x96xf32>
    %8 = arith.maximumf %6, %7 : vector<64x96xf32>
    %c0_6 = arith.constant 0 : index
    %c0_7 = arith.constant 0 : index
    %9 = vector.load %arg1[%c0_6, %c0_7] : memref<64x96xf32, #tpu.memory_space<vmem>>, vector<64x96xf32>
    %10 = arith.mulf %8, %9 : vector<64x96xf32>
    %11 = arith.truncf %10 : vector<64x96xf32> to vector<64x96xbf16>
    %c0_8 = arith.constant 0 : index
    %c0_9 = arith.constant 0 : index
    %12 = vector.load %arg4[%c0_8, %c0_9] : memref<96x32xbf16, #tpu.memory_space<vmem>>, vector<96x32xbf16>
    %cst_10 = arith.constant dense<0.000000e+00> : vector<64x32xf32>
    %13 = tpu.matmul %11, %12, %cst_10 {dimension_numbers = #tpu.dot_dimension_numbers<[1], [0], [0], [1], [0, 0, 1, 1], [], []>} : vector<64x96xbf16>, vector<96x32xbf16>, vector<64x32xf32> -> vector<64x32xf32>
    %c0_11 = arith.constant 0 : index
    %c0_12 = arith.constant 0 : index
    %14 = vector.load %arg5[%c0_11, %c0_12] : memref<1x32xf32, #tpu.memory_space<vmem>>, vector<1x32xf32>
    %15 = vector.broadcast %14 : vector<1x32xf32> to vector<64x32xf32>
    %16 = arith.addf %13, %15 : vector<64x32xf32>
    %cst_13 = arith.constant 0.000000e+00 : f32
    %17 = vector.broadcast %cst_13 : f32 to vector<64x32xf32>
    %18 = arith.maximumf %16, %17 : vector<64x32xf32>
    %19 = vector.extract_strided_slice %18 {offsets = [0, 0], sizes = [4, 32], strides = [1, 1]} : vector<64x32xf32> to vector<4x32xf32>
    %c0_14 = arith.constant 0 : index
    %c0_15 = arith.constant 0 : index
    %20 = vector.load %arg15[%c0_14, %c0_15] : memref<4x512xf32, #tpu.memory_space<vmem>>, vector<4x32xf32>
    tpu.vector_store %arg15[%c0_14, %c0_15], %19 {strides = array<i32>} : memref<4x512xf32, #tpu.memory_space<vmem>>, vector<4x32xf32>,
    %21 = vector.extract_strided_slice %18 {offsets = [4, 0], sizes = [4, 32], strides = [1, 1]} : vector<64x32xf32> to vector<4x32xf32>
    %c0_16 = arith.constant 0 : index
    %c32 = arith.constant 32 : index
    %22 = vector.load %arg15[%c0_16, %c32] : memref<4x512xf32, #tpu.memory_space<vmem>>, vector<4x32xf32>
    tpu.vector_store %arg15[%c0_16, %c32], %21 {strides = array<i32>} : memref<4x512xf32, #tpu.memory_space<vmem>>, vector<4x32xf32>,
    %23 = vector.extract_strided_slice %18 {offsets = [8, 0], sizes = [4, 32], strides = [1, 1]} : vector<64x32xf32> to vector<4x32xf32>
    %c0_17 = arith.constant 0 : index
    %c64 = arith.constant 64 : index
    %24 = vector.load %arg15[%c0_17, %c64] : memref<4x512xf32, #tpu.memory_space<vmem>>, vector<4x32xf32>
    tpu.vector_store %arg15[%c0_17, %c64], %23 {strides = array<i32>} : memref<4x512xf32, #tpu.memory_space<vmem>>, vector<4x32xf32>,
    %25 = vector.extract_strided_slice %18 {offsets = [12, 0], sizes = [4, 32], strides = [1, 1]} : vector<64x32xf32> to vector<4x32xf32>
    %c0_18 = arith.constant 0 : index
    %c96 = arith.constant 96 : index
    %26 = vector.load %arg15[%c0_18, %c96] : memref<4x512xf32, #tpu.memory_space<vmem>>, vector<4x32xf32>
    tpu.vector_store %arg15[%c0_18, %c96], %25 {strides = array<i32>} : memref<4x512xf32, #tpu.memory_space<vmem>>, vector<4x32xf32>,
    %27 = vector.extract_strided_slice %18 {offsets = [16, 0], sizes = [4, 32], strides = [1, 1]} : vector<64x32xf32> to vector<4x32xf32>
    %c0_19 = arith.constant 0 : index
    %c128 = arith.constant 128 : index
    %28 = vector.load %arg15[%c0_19, %c128] : memref<4x512xf32, #tpu.memory_space<vmem>>, vector<4x32xf32>
    tpu.vector_store %arg15[%c0_19, %c128], %27 {strides = array<i32>} : memref<4x512xf32, #tpu.memory_space<vmem>>, vector<4x32xf32>,
    %29 = vector.extract_strided_slice %18 {offsets = [20, 0], sizes = [4, 32], strides = [1, 1]} : vector<64x32xf32> to vector<4x32xf32>
    %c0_20 = arith.constant 0 : index
    %c160 = arith.constant 160 : index
    %30 = vector.load %arg15[%c0_20, %c160] : memref<4x512xf32, #tpu.memory_space<vmem>>, vector<4x32xf32>
    tpu.vector_store %arg15[%c0_20, %c160], %29 {strides = array<i32>} : memref<4x512xf32, #tpu.memory_space<vmem>>, vector<4x32xf32>,
    %31 = vector.extract_strided_slice %18 {offsets = [24, 0], sizes = [4, 32], strides = [1, 1]} : vector<64x32xf32> to vector<4x32xf32>
    %c0_21 = arith.constant 0 : index
    %c192 = arith.constant 192 : index
    %32 = vector.load %arg15[%c0_21, %c192] : memref<4x512xf32, #tpu.memory_space<vmem>>, vector<4x32xf32>
    tpu.vector_store %arg15[%c0_21, %c192], %31 {strides = array<i32>} : memref<4x512xf32, #tpu.memory_space<vmem>>, vector<4x32xf32>,
    %33 = vector.extract_strided_slice %18 {offsets = [28, 0], sizes = [4, 32], strides = [1, 1]} : vector<64x32xf32> to vector<4x32xf32>
    %c0_22 = arith.constant 0 : index
    %c224 = arith.constant 224 : index
    %34 = vector.load %arg15[%c0_22, %c224] : memref<4x512xf32, #tpu.memory_space<vmem>>, vector<4x32xf32>
    tpu.vector_store %arg15[%c0_22, %c224], %33 {strides = array<i32>} : memref<4x512xf32, #tpu.memory_space<vmem>>, vector<4x32xf32>,
    %35 = vector.extract_strided_slice %18 {offsets = [32, 0], sizes = [4, 32], strides = [1, 1]} : vector<64x32xf32> to vector<4x32xf32>
    %c0_23 = arith.constant 0 : index
    %c256 = arith.constant 256 : index
    %36 = vector.load %arg15[%c0_23, %c256] : memref<4x512xf32, #tpu.memory_space<vmem>>, vector<4x32xf32>
    tpu.vector_store %arg15[%c0_23, %c256], %35 {strides = array<i32>} : memref<4x512xf32, #tpu.memory_space<vmem>>, vector<4x32xf32>,
    %37 = vector.extract_strided_slice %18 {offsets = [36, 0], sizes = [4, 32], strides = [1, 1]} : vector<64x32xf32> to vector<4x32xf32>
    %c0_24 = arith.constant 0 : index
    %c288 = arith.constant 288 : index
    %38 = vector.load %arg15[%c0_24, %c288] : memref<4x512xf32, #tpu.memory_space<vmem>>, vector<4x32xf32>
    tpu.vector_store %arg15[%c0_24, %c288], %37 {strides = array<i32>} : memref<4x512xf32, #tpu.memory_space<vmem>>, vector<4x32xf32>,
    %39 = vector.extract_strided_slice %18 {offsets = [40, 0], sizes = [4, 32], strides = [1, 1]} : vector<64x32xf32> to vector<4x32xf32>
    %c0_25 = arith.constant 0 : index
    %c320 = arith.constant 320 : index
    %40 = vector.load %arg15[%c0_25, %c320] : memref<4x512xf32, #tpu.memory_space<vmem>>, vector<4x32xf32>
    tpu.vector_store %arg15[%c0_25, %c320], %39 {strides = array<i32>} : memref<4x512xf32, #tpu.memory_space<vmem>>, vector<4x32xf32>,
    %41 = vector.extract_strided_slice %18 {offsets = [44, 0], sizes = [4, 32], strides = [1, 1]} : vector<64x32xf32> to vector<4x32xf32>
    %c0_26 = arith.constant 0 : index
    %c352 = arith.constant 352 : index
    %42 = vector.load %arg15[%c0_26, %c352] : memref<4x512xf32, #tpu.memory_space<vmem>>, vector<4x32xf32>
    tpu.vector_store %arg15[%c0_26, %c352], %41 {strides = array<i32>} : memref<4x512xf32, #tpu.memory_space<vmem>>, vector<4x32xf32>,
    %43 = vector.extract_strided_slice %18 {offsets = [48, 0], sizes = [4, 32], strides = [1, 1]} : vector<64x32xf32> to vector<4x32xf32>
    %c0_27 = arith.constant 0 : index
    %c384 = arith.constant 384 : index
    %44 = vector.load %arg15[%c0_27, %c384] : memref<4x512xf32, #tpu.memory_space<vmem>>, vector<4x32xf32>
    tpu.vector_store %arg15[%c0_27, %c384], %43 {strides = array<i32>} : memref<4x512xf32, #tpu.memory_space<vmem>>, vector<4x32xf32>,
    %45 = vector.extract_strided_slice %18 {offsets = [52, 0], sizes = [4, 32], strides = [1, 1]} : vector<64x32xf32> to vector<4x32xf32>
    %c0_28 = arith.constant 0 : index
    %c416 = arith.constant 416 : index
    %46 = vector.load %arg15[%c0_28, %c416] : memref<4x512xf32, #tpu.memory_space<vmem>>, vector<4x32xf32>
    tpu.vector_store %arg15[%c0_28, %c416], %45 {strides = array<i32>} : memref<4x512xf32, #tpu.memory_space<vmem>>, vector<4x32xf32>,
    %47 = vector.extract_strided_slice %18 {offsets = [56, 0], sizes = [4, 32], strides = [1, 1]} : vector<64x32xf32> to vector<4x32xf32>
    %c0_29 = arith.constant 0 : index
    %c448 = arith.constant 448 : index
    %48 = vector.load %arg15[%c0_29, %c448] : memref<4x512xf32, #tpu.memory_space<vmem>>, vector<4x32xf32>
    tpu.vector_store %arg15[%c0_29, %c448], %47 {strides = array<i32>} : memref<4x512xf32, #tpu.memory_space<vmem>>, vector<4x32xf32>,
    %49 = vector.extract_strided_slice %18 {offsets = [60, 0], sizes = [4, 32], strides = [1, 1]} : vector<64x32xf32> to vector<4x32xf32>
    %c0_30 = arith.constant 0 : index
    %c480 = arith.constant 480 : index
    %50 = vector.load %arg15[%c0_30, %c480] : memref<4x512xf32, #tpu.memory_space<vmem>>, vector<4x32xf32>
    tpu.vector_store %arg15[%c0_30, %c480], %49 {strides = array<i32>} : memref<4x512xf32, #tpu.memory_space<vmem>>, vector<4x32xf32>,
    %c0_31 = arith.constant 0 : index
    %c0_32 = arith.constant 0 : index
    %51 = vector.load %arg15[%c0_31, %c0_32] : memref<4x512xf32, #tpu.memory_space<vmem>>, vector<4x512xf32>
    %52 = arith.truncf %51 : vector<4x512xf32> to vector<4x512xbf16>
    %c0_33 = arith.constant 0 : index
    %c0_34 = arith.constant 0 : index
    %53 = vector.load %arg6[%c0_33, %c0_34] : memref<512x128xbf16, #tpu.memory_space<vmem>>, vector<512x128xbf16>
    %cst_35 = arith.constant dense<0.000000e+00> : vector<4x128xf32>
    %54 = tpu.matmul %52, %53, %cst_35 {dimension_numbers = #tpu.dot_dimension_numbers<[1], [0], [0], [1], [0, 0, 1, 1], [], []>} : vector<4x512xbf16>, vector<512x128xbf16>, vector<4x128xf32> -> vector<4x128xf32>
    %c0_36 = arith.constant 0 : index
    %c0_37 = arith.constant 0 : index
    %55 = vector.load %arg7[%c0_36, %c0_37] : memref<1x128xf32, #tpu.memory_space<vmem>>, vector<1x128xf32>
    %56 = vector.broadcast %55 : vector<1x128xf32> to vector<4x128xf32>
    %57 = arith.addf %54, %56 : vector<4x128xf32>
    %c0_38 = arith.constant 0 : index
    %c0_39 = arith.constant 0 : index
    %58 = vector.load %arg8[%c0_38, %c0_39] : memref<32x128xbf16, #tpu.memory_space<vmem>>, vector<32x128xbf16>
    %c0_40 = arith.constant 0 : index
    %c0_41 = arith.constant 0 : index
    %59 = vector.load %arg9[%c0_40, %c0_41] : memref<32x128xbf16, #tpu.memory_space<vmem>>, vector<32x128xbf16>
    %c0_42 = arith.constant 0 : index
    %c0_43 = arith.constant 0 : index
    %60 = vector.load %arg10[%c0_42, %c0_43] : memref<32x128xbf16, #tpu.memory_space<vmem>>, vector<32x128xbf16>
    %c0_44 = arith.constant 0 : index
    %c0_45 = arith.constant 0 : index
    %61 = vector.load %arg11[%c0_44, %c0_45] : memref<1x128xf32, #tpu.memory_space<vmem>>, vector<1x128xf32>
    %cst_46 = arith.constant 0.000000e+00 : f32
    %62 = vector.broadcast %cst_46 : f32 to vector<1x32xf32>
    %cst_47 = arith.constant 0.000000e+00 : f32
    %63 = vector.broadcast %cst_47 : f32 to vector<1x32xf32>
    %cst_48 = arith.constant 0.000000e+00 : f32
    %64 = vector.broadcast %cst_48 : f32 to vector<1x32xf32>
    %cst_49 = arith.constant 0.000000e+00 : f32
    %65 = vector.broadcast %cst_49 : f32 to vector<1x32xf32>
    %66 = tpu.iota {dimensions = array<i32: 0>} : vector<4x1xi32>
    %cst_50 = arith.constant 0.000000e+00 : f32
    %67 = vector.broadcast %cst_50 : f32 to vector<4x32xf32>
    %68 = arith.truncf %64 : vector<1x32xf32> to vector<1x32xbf16>
    %cst_51 = arith.constant dense<0.000000e+00> : vector<1x128xf32>
    %69 = tpu.matmul %68, %60, %cst_51 {dimension_numbers = #tpu.dot_dimension_numbers<[1], [0], [0], [1], [0, 0, 1, 1], [], []>} : vector<1x32xbf16>, vector<32x128xbf16>, vector<1x128xf32> -> vector<1x128xf32>
    %70 = arith.addf %69, %61 : vector<1x128xf32>
    %71 = vector.extract_strided_slice %57 {offsets = [0, 0], sizes = [1, 128], strides = [1, 1]} : vector<4x128xf32> to vector<1x128xf32>
    %72 = arith.truncf %62 : vector<1x32xf32> to vector<1x32xbf16>
    %cst_52 = arith.constant dense<0.000000e+00> : vector<1x128xf32>
    %73 = tpu.matmul %72, %58, %cst_52 {dimension_numbers = #tpu.dot_dimension_numbers<[1], [0], [0], [1], [0, 0, 1, 1], [], []>} : vector<1x32xbf16>, vector<32x128xbf16>, vector<1x128xf32> -> vector<1x128xf32>
    %74 = arith.addf %71, %73 : vector<1x128xf32>
    %75 = arith.negf %74 : vector<1x128xf32>
    %76 = math.exp %75 : vector<1x128xf32>
    %cst_53 = arith.constant 1.000000e+00 : f32
    %77 = vector.broadcast %cst_53 : f32 to vector<1x128xf32>
    %78 = arith.addf %77, %76 : vector<1x128xf32>
    %79 = arith.divf %77, %78 : vector<1x128xf32>
    %80 = math.tanh %74 : vector<1x128xf32>
    %81 = vector.extract_strided_slice %79 {offsets = [0, 0], sizes = [1, 32], strides = [1, 1]} : vector<1x128xf32> to vector<1x32xf32>
    %82 = vector.extract_strided_slice %79 {offsets = [0, 32], sizes = [1, 32], strides = [1, 1]} : vector<1x128xf32> to vector<1x32xf32>
    %83 = vector.extract_strided_slice %80 {offsets = [0, 64], sizes = [1, 32], strides = [1, 1]} : vector<1x128xf32> to vector<1x32xf32>
    %84 = vector.extract_strided_slice %79 {offsets = [0, 96], sizes = [1, 32], strides = [1, 1]} : vector<1x128xf32> to vector<1x32xf32>
    %85 = arith.mulf %82, %63 : vector<1x32xf32>
    %86 = arith.mulf %81, %83 : vector<1x32xf32>
    %87 = arith.addf %85, %86 : vector<1x32xf32>
    %88 = math.tanh %87 : vector<1x32xf32>
    %89 = arith.mulf %84, %88 : vector<1x32xf32>
    %90 = arith.truncf %89 : vector<1x32xf32> to vector<1x32xbf16>
    %cst_54 = arith.constant dense<0.000000e+00> : vector<1x128xf32>
    %91 = tpu.matmul %90, %59, %cst_54 {dimension_numbers = #tpu.dot_dimension_numbers<[1], [0], [0], [1], [0, 0, 1, 1], [], []>} : vector<1x32xbf16>, vector<32x128xbf16>, vector<1x128xf32> -> vector<1x128xf32>
    %92 = arith.addf %91, %70 : vector<1x128xf32>
    %93 = arith.negf %92 : vector<1x128xf32>
    %94 = math.exp %93 : vector<1x128xf32>
    %cst_55 = arith.constant 1.000000e+00 : f32
    %95 = vector.broadcast %cst_55 : f32 to vector<1x128xf32>
    %96 = arith.addf %95, %94 : vector<1x128xf32>
    %97 = arith.divf %95, %96 : vector<1x128xf32>
    %98 = math.tanh %92 : vector<1x128xf32>
    %99 = vector.extract_strided_slice %97 {offsets = [0, 0], sizes = [1, 32], strides = [1, 1]} : vector<1x128xf32> to vector<1x32xf32>
    %100 = vector.extract_strided_slice %97 {offsets = [0, 32], sizes = [1, 32], strides = [1, 1]} : vector<1x128xf32> to vector<1x32xf32>
    %101 = vector.extract_strided_slice %98 {offsets = [0, 64], sizes = [1, 32], strides = [1, 1]} : vector<1x128xf32> to vector<1x32xf32>
    %102 = vector.extract_strided_slice %97 {offsets = [0, 96], sizes = [1, 32], strides = [1, 1]} : vector<1x128xf32> to vector<1x32xf32>
    %103 = arith.mulf %100, %65 : vector<1x32xf32>
    %104 = arith.mulf %99, %101 : vector<1x32xf32>
    %105 = arith.addf %103, %104 : vector<1x32xf32>
    %106 = math.tanh %105 : vector<1x32xf32>
    %107 = arith.mulf %102, %106 : vector<1x32xf32>
    %c0_i32 = arith.constant 0 : i32
    %108 = vector.broadcast %c0_i32 : i32 to vector<4x1xi32>
    %109 = arith.cmpi eq, %66, %108 : vector<4x1xi32>
    %110 = arith.extui %109 : vector<4x1xi1> to vector<4x1xi32>
    %111 = arith.sitofp %110 : vector<4x1xi32> to vector<4x1xf32>
    %112 = vector.broadcast %111 : vector<4x1xf32> to vector<4x32xf32>
    %113 = vector.broadcast %107 : vector<1x32xf32> to vector<4x32xf32>
    %114 = arith.mulf %112, %113 : vector<4x32xf32>
    %115 = arith.addf %67, %114 : vector<4x32xf32>
    %116 = arith.truncf %107 : vector<1x32xf32> to vector<1x32xbf16>
    %cst_56 = arith.constant dense<0.000000e+00> : vector<1x128xf32>
    %117 = tpu.matmul %116, %60, %cst_56 {dimension_numbers = #tpu.dot_dimension_numbers<[1], [0], [0], [1], [0, 0, 1, 1], [], []>} : vector<1x32xbf16>, vector<32x128xbf16>, vector<1x128xf32> -> vector<1x128xf32>
    %118 = arith.addf %117, %61 : vector<1x128xf32>
    %119 = vector.extract_strided_slice %57 {offsets = [1, 0], sizes = [1, 128], strides = [1, 1]} : vector<4x128xf32> to vector<1x128xf32>
    %120 = arith.truncf %89 : vector<1x32xf32> to vector<1x32xbf16>
    %cst_57 = arith.constant dense<0.000000e+00> : vector<1x128xf32>
    %121 = tpu.matmul %120, %58, %cst_57 {dimension_numbers = #tpu.dot_dimension_numbers<[1], [0], [0], [1], [0, 0, 1, 1], [], []>} : vector<1x32xbf16>, vector<32x128xbf16>, vector<1x128xf32> -> vector<1x128xf32>
    %122 = arith.addf %119, %121 : vector<1x128xf32>
    %123 = arith.negf %122 : vector<1x128xf32>
    %124 = math.exp %123 : vector<1x128xf32>
    %cst_58 = arith.constant 1.000000e+00 : f32
    %125 = vector.broadcast %cst_58 : f32 to vector<1x128xf32>
    %126 = arith.addf %125, %124 : vector<1x128xf32>
    %127 = arith.divf %125, %126 : vector<1x128xf32>
    %128 = math.tanh %122 : vector<1x128xf32>
    %129 = vector.extract_strided_slice %127 {offsets = [0, 0], sizes = [1, 32], strides = [1, 1]} : vector<1x128xf32> to vector<1x32xf32>
    %130 = vector.extract_strided_slice %127 {offsets = [0, 32], sizes = [1, 32], strides = [1, 1]} : vector<1x128xf32> to vector<1x32xf32>
    %131 = vector.extract_strided_slice %128 {offsets = [0, 64], sizes = [1, 32], strides = [1, 1]} : vector<1x128xf32> to vector<1x32xf32>
    %132 = vector.extract_strided_slice %127 {offsets = [0, 96], sizes = [1, 32], strides = [1, 1]} : vector<1x128xf32> to vector<1x32xf32>
    %133 = arith.mulf %130, %87 : vector<1x32xf32>
    %134 = arith.mulf %129, %131 : vector<1x32xf32>
    %135 = arith.addf %133, %134 : vector<1x32xf32>
    %136 = math.tanh %135 : vector<1x32xf32>
    %137 = arith.mulf %132, %136 : vector<1x32xf32>
    %138 = arith.truncf %137 : vector<1x32xf32> to vector<1x32xbf16>
    %cst_59 = arith.constant dense<0.000000e+00> : vector<1x128xf32>
    %139 = tpu.matmul %138, %59, %cst_59 {dimension_numbers = #tpu.dot_dimension_numbers<[1], [0], [0], [1], [0, 0, 1, 1], [], []>} : vector<1x32xbf16>, vector<32x128xbf16>, vector<1x128xf32> -> vector<1x128xf32>
    %140 = arith.addf %139, %118 : vector<1x128xf32>
    %141 = arith.negf %140 : vector<1x128xf32>
    %142 = math.exp %141 : vector<1x128xf32>
    %cst_60 = arith.constant 1.000000e+00 : f32
    %143 = vector.broadcast %cst_60 : f32 to vector<1x128xf32>
    %144 = arith.addf %143, %142 : vector<1x128xf32>
    %145 = arith.divf %143, %144 : vector<1x128xf32>
    %146 = math.tanh %140 : vector<1x128xf32>
    %147 = vector.extract_strided_slice %145 {offsets = [0, 0], sizes = [1, 32], strides = [1, 1]} : vector<1x128xf32> to vector<1x32xf32>
    %148 = vector.extract_strided_slice %145 {offsets = [0, 32], sizes = [1, 32], strides = [1, 1]} : vector<1x128xf32> to vector<1x32xf32>
    %149 = vector.extract_strided_slice %146 {offsets = [0, 64], sizes = [1, 32], strides = [1, 1]} : vector<1x128xf32> to vector<1x32xf32>
    %150 = vector.extract_strided_slice %145 {offsets = [0, 96], sizes = [1, 32], strides = [1, 1]} : vector<1x128xf32> to vector<1x32xf32>
    %151 = arith.mulf %148, %105 : vector<1x32xf32>
    %152 = arith.mulf %147, %149 : vector<1x32xf32>
    %153 = arith.addf %151, %152 : vector<1x32xf32>
    %154 = math.tanh %153 : vector<1x32xf32>
    %155 = arith.mulf %150, %154 : vector<1x32xf32>
    %c1_i32 = arith.constant 1 : i32
    %156 = vector.broadcast %c1_i32 : i32 to vector<4x1xi32>
    %157 = arith.cmpi eq, %66, %156 : vector<4x1xi32>
    %158 = arith.extui %157 : vector<4x1xi1> to vector<4x1xi32>
    %159 = arith.sitofp %158 : vector<4x1xi32> to vector<4x1xf32>
    %160 = vector.broadcast %159 : vector<4x1xf32> to vector<4x32xf32>
    %161 = vector.broadcast %155 : vector<1x32xf32> to vector<4x32xf32>
    %162 = arith.mulf %160, %161 : vector<4x32xf32>
    %163 = arith.addf %115, %162 : vector<4x32xf32>
    %164 = arith.truncf %155 : vector<1x32xf32> to vector<1x32xbf16>
    %cst_61 = arith.constant dense<0.000000e+00> : vector<1x128xf32>
    %165 = tpu.matmul %164, %60, %cst_61 {dimension_numbers = #tpu.dot_dimension_numbers<[1], [0], [0], [1], [0, 0, 1, 1], [], []>} : vector<1x32xbf16>, vector<32x128xbf16>, vector<1x128xf32> -> vector<1x128xf32>
    %166 = arith.addf %165, %61 : vector<1x128xf32>
    %167 = vector.extract_strided_slice %57 {offsets = [2, 0], sizes = [1, 128], strides = [1, 1]} : vector<4x128xf32> to vector<1x128xf32>
    %168 = arith.truncf %137 : vector<1x32xf32> to vector<1x32xbf16>
    %cst_62 = arith.constant dense<0.000000e+00> : vector<1x128xf32>
    %169 = tpu.matmul %168, %58, %cst_62 {dimension_numbers = #tpu.dot_dimension_numbers<[1], [0], [0], [1], [0, 0, 1, 1], [], []>} : vector<1x32xbf16>, vector<32x128xbf16>, vector<1x128xf32> -> vector<1x128xf32>
    %170 = arith.addf %167, %169 : vector<1x128xf32>
    %171 = arith.negf %170 : vector<1x128xf32>
    %172 = math.exp %171 : vector<1x128xf32>
    %cst_63 = arith.constant 1.000000e+00 : f32
    %173 = vector.broadcast %cst_63 : f32 to vector<1x128xf32>
    %174 = arith.addf %173, %172 : vector<1x128xf32>
    %175 = arith.divf %173, %174 : vector<1x128xf32>
    %176 = math.tanh %170 : vector<1x128xf32>
    %177 = vector.extract_strided_slice %175 {offsets = [0, 0], sizes = [1, 32], strides = [1, 1]} : vector<1x128xf32> to vector<1x32xf32>
    %178 = vector.extract_strided_slice %175 {offsets = [0, 32], sizes = [1, 32], strides = [1, 1]} : vector<1x128xf32> to vector<1x32xf32>
    %179 = vector.extract_strided_slice %176 {offsets = [0, 64], sizes = [1, 32], strides = [1, 1]} : vector<1x128xf32> to vector<1x32xf32>
    %180 = vector.extract_strided_slice %175 {offsets = [0, 96], sizes = [1, 32], strides = [1, 1]} : vector<1x128xf32> to vector<1x32xf32>
    %181 = arith.mulf %178, %135 : vector<1x32xf32>
    %182 = arith.mulf %177, %179 : vector<1x32xf32>
    %183 = arith.addf %181, %182 : vector<1x32xf32>
    %184 = math.tanh %183 : vector<1x32xf32>
    %185 = arith.mulf %180, %184 : vector<1x32xf32>
    %186 = arith.truncf %185 : vector<1x32xf32> to vector<1x32xbf16>
    %cst_64 = arith.constant dense<0.000000e+00> : vector<1x128xf32>
    %187 = tpu.matmul %186, %59, %cst_64 {dimension_numbers = #tpu.dot_dimension_numbers<[1], [0], [0], [1], [0, 0, 1, 1], [], []>} : vector<1x32xbf16>, vector<32x128xbf16>, vector<1x128xf32> -> vector<1x128xf32>
    %188 = arith.addf %187, %166 : vector<1x128xf32>
    %189 = arith.negf %188 : vector<1x128xf32>
    %190 = math.exp %189 : vector<1x128xf32>
    %cst_65 = arith.constant 1.000000e+00 : f32
    %191 = vector.broadcast %cst_65 : f32 to vector<1x128xf32>
    %192 = arith.addf %191, %190 : vector<1x128xf32>
    %193 = arith.divf %191, %192 : vector<1x128xf32>
    %194 = math.tanh %188 : vector<1x128xf32>
    %195 = vector.extract_strided_slice %193 {offsets = [0, 0], sizes = [1, 32], strides = [1, 1]} : vector<1x128xf32> to vector<1x32xf32>
    %196 = vector.extract_strided_slice %193 {offsets = [0, 32], sizes = [1, 32], strides = [1, 1]} : vector<1x128xf32> to vector<1x32xf32>
    %197 = vector.extract_strided_slice %194 {offsets = [0, 64], sizes = [1, 32], strides = [1, 1]} : vector<1x128xf32> to vector<1x32xf32>
    %198 = vector.extract_strided_slice %193 {offsets = [0, 96], sizes = [1, 32], strides = [1, 1]} : vector<1x128xf32> to vector<1x32xf32>
    %199 = arith.mulf %196, %153 : vector<1x32xf32>
    %200 = arith.mulf %195, %197 : vector<1x32xf32>
    %201 = arith.addf %199, %200 : vector<1x32xf32>
    %202 = math.tanh %201 : vector<1x32xf32>
    %203 = arith.mulf %198, %202 : vector<1x32xf32>
    %c2_i32 = arith.constant 2 : i32
    %204 = vector.broadcast %c2_i32 : i32 to vector<4x1xi32>
    %205 = arith.cmpi eq, %66, %204 : vector<4x1xi32>
    %206 = arith.extui %205 : vector<4x1xi1> to vector<4x1xi32>
    %207 = arith.sitofp %206 : vector<4x1xi32> to vector<4x1xf32>
    %208 = vector.broadcast %207 : vector<4x1xf32> to vector<4x32xf32>
    %209 = vector.broadcast %203 : vector<1x32xf32> to vector<4x32xf32>
    %210 = arith.mulf %208, %209 : vector<4x32xf32>
    %211 = arith.addf %163, %210 : vector<4x32xf32>
    %212 = arith.truncf %203 : vector<1x32xf32> to vector<1x32xbf16>
    %cst_66 = arith.constant dense<0.000000e+00> : vector<1x128xf32>
    %213 = tpu.matmul %212, %60, %cst_66 {dimension_numbers = #tpu.dot_dimension_numbers<[1], [0], [0], [1], [0, 0, 1, 1], [], []>} : vector<1x32xbf16>, vector<32x128xbf16>, vector<1x128xf32> -> vector<1x128xf32>
    %214 = arith.addf %213, %61 : vector<1x128xf32>
    %215 = vector.extract_strided_slice %57 {offsets = [3, 0], sizes = [1, 128], strides = [1, 1]} : vector<4x128xf32> to vector<1x128xf32>
    %216 = arith.truncf %185 : vector<1x32xf32> to vector<1x32xbf16>
    %cst_67 = arith.constant dense<0.000000e+00> : vector<1x128xf32>
    %217 = tpu.matmul %216, %58, %cst_67 {dimension_numbers = #tpu.dot_dimension_numbers<[1], [0], [0], [1], [0, 0, 1, 1], [], []>} : vector<1x32xbf16>, vector<32x128xbf16>, vector<1x128xf32> -> vector<1x128xf32>
    %218 = arith.addf %215, %217 : vector<1x128xf32>
    %219 = arith.negf %218 : vector<1x128xf32>
    %220 = math.exp %219 : vector<1x128xf32>
    %cst_68 = arith.constant 1.000000e+00 : f32
    %221 = vector.broadcast %cst_68 : f32 to vector<1x128xf32>
    %222 = arith.addf %221, %220 : vector<1x128xf32>
    %223 = arith.divf %221, %222 : vector<1x128xf32>
    %224 = math.tanh %218 : vector<1x128xf32>
    %225 = vector.extract_strided_slice %223 {offsets = [0, 0], sizes = [1, 32], strides = [1, 1]} : vector<1x128xf32> to vector<1x32xf32>
    %226 = vector.extract_strided_slice %223 {offsets = [0, 32], sizes = [1, 32], strides = [1, 1]} : vector<1x128xf32> to vector<1x32xf32>
    %227 = vector.extract_strided_slice %224 {offsets = [0, 64], sizes = [1, 32], strides = [1, 1]} : vector<1x128xf32> to vector<1x32xf32>
    %228 = vector.extract_strided_slice %223 {offsets = [0, 96], sizes = [1, 32], strides = [1, 1]} : vector<1x128xf32> to vector<1x32xf32>
    %229 = arith.mulf %226, %183 : vector<1x32xf32>
    %230 = arith.mulf %225, %227 : vector<1x32xf32>
    %231 = arith.addf %229, %230 : vector<1x32xf32>
    %232 = math.tanh %231 : vector<1x32xf32>
    %233 = arith.mulf %228, %232 : vector<1x32xf32>
    %234 = arith.truncf %233 : vector<1x32xf32> to vector<1x32xbf16>
    %cst_69 = arith.constant dense<0.000000e+00> : vector<1x128xf32>
    %235 = tpu.matmul %234, %59, %cst_69 {dimension_numbers = #tpu.dot_dimension_numbers<[1], [0], [0], [1], [0, 0, 1, 1], [], []>} : vector<1x32xbf16>, vector<32x128xbf16>, vector<1x128xf32> -> vector<1x128xf32>
    %236 = arith.addf %235, %214 : vector<1x128xf32>
    %237 = arith.negf %236 : vector<1x128xf32>
    %238 = math.exp %237 : vector<1x128xf32>
    %cst_70 = arith.constant 1.000000e+00 : f32
    %239 = vector.broadcast %cst_70 : f32 to vector<1x128xf32>
    %240 = arith.addf %239, %238 : vector<1x128xf32>
    %241 = arith.divf %239, %240 : vector<1x128xf32>
    %242 = math.tanh %236 : vector<1x128xf32>
    %243 = vector.extract_strided_slice %241 {offsets = [0, 0], sizes = [1, 32], strides = [1, 1]} : vector<1x128xf32> to vector<1x32xf32>
    %244 = vector.extract_strided_slice %241 {offsets = [0, 32], sizes = [1, 32], strides = [1, 1]} : vector<1x128xf32> to vector<1x32xf32>
    %245 = vector.extract_strided_slice %242 {offsets = [0, 64], sizes = [1, 32], strides = [1, 1]} : vector<1x128xf32> to vector<1x32xf32>
    %246 = vector.extract_strided_slice %241 {offsets = [0, 96], sizes = [1, 32], strides = [1, 1]} : vector<1x128xf32> to vector<1x32xf32>
    %247 = arith.mulf %244, %201 : vector<1x32xf32>
    %248 = arith.mulf %243, %245 : vector<1x32xf32>
    %249 = arith.addf %247, %248 : vector<1x32xf32>
    %250 = math.tanh %249 : vector<1x32xf32>
    %251 = arith.mulf %246, %250 : vector<1x32xf32>
    %c3_i32 = arith.constant 3 : i32
    %252 = vector.broadcast %c3_i32 : i32 to vector<4x1xi32>
    %253 = arith.cmpi eq, %66, %252 : vector<4x1xi32>
    %254 = arith.extui %253 : vector<4x1xi1> to vector<4x1xi32>
    %255 = arith.sitofp %254 : vector<4x1xi32> to vector<4x1xf32>
    %256 = vector.broadcast %255 : vector<4x1xf32> to vector<4x32xf32>
    %257 = vector.broadcast %251 : vector<1x32xf32> to vector<4x32xf32>
    %258 = arith.mulf %256, %257 : vector<4x32xf32>
    %259 = arith.addf %211, %258 : vector<4x32xf32>
    %260 = arith.truncf %259 : vector<4x32xf32> to vector<4x32xbf16>
    %c0_71 = arith.constant 0 : index
    %c0_72 = arith.constant 0 : index
    %261 = vector.load %arg12[%c0_71, %c0_72] : memref<32x8xbf16, #tpu.memory_space<vmem>>, vector<32x8xbf16>
    %cst_73 = arith.constant dense<0.000000e+00> : vector<4x8xf32>
    %262 = tpu.matmul %260, %261, %cst_73 {dimension_numbers = #tpu.dot_dimension_numbers<[1], [0], [0], [1], [0, 0, 1, 1], [], []>} : vector<4x32xbf16>, vector<32x8xbf16>, vector<4x8xf32> -> vector<4x8xf32>
    %c0_74 = arith.constant 0 : index
    %c0_75 = arith.constant 0 : index
    %263 = vector.load %arg13[%c0_74, %c0_75] : memref<1x8xf32, #tpu.memory_space<vmem>>, vector<1x8xf32>
    %264 = vector.broadcast %263 : vector<1x8xf32> to vector<4x8xf32>
    %265 = arith.addf %262, %264 : vector<4x8xf32>
    %c0_76 = arith.constant 0 : index
    %c0_77 = arith.constant 0 : index
    %266 = vector.load %arg14[%c0_76, %c0_77] : memref<4x8xf32, #tpu.memory_space<vmem>>, vector<4x8xf32>
    tpu.vector_store %arg14[%c0_76, %c0_77], %265 {strides = array<i32>} : memref<4x8xf32, #tpu.memory_space<vmem>>, vector<4x8xf32>,
    return
  }
}

</mosaic_0001>

<llo_original>
// kernel: cnn_lstm_forward.1
$region0: #{cnn_lstm_forward.1}
  #allocation0 [shape = 'u32[]', space=smem, size = 0x4, offset = 0x4, fixed_abs, tag = 'smem constant byte address 0x4 - core index']
  #allocation1 [shape = 'u32[144,128]{1,0:T(1,128)}', space=vmem, size = 0x12000, scoped, tag = 'internal scratch']
  #allocation2 [shape = 'f32[4,512]{1,0:T(4,128)}', space=vmem, size = 0x2000, scoped, tag = 'scratch operand']
  %s0 = inlined_call_operand.vmem [shape: f32[64,5], index: 0, kind: input, shape index: {}]
  %s1 = inlined_call_operand.vmem [shape: f32[64,96], index: 1, kind: input, shape index: {}]
  %s2 = inlined_call_operand.vmem [shape: bf16[5,96], index: 2, kind: input, shape index: {}]
  %s3 = inlined_call_operand.vmem [shape: f32[1,96], index: 3, kind: input, shape index: {}]
  %s4 = inlined_call_operand.vmem [shape: bf16[96,32], index: 4, kind: input, shape index: {}]
  %s5 = inlined_call_operand.vmem [shape: f32[1,32], index: 5, kind: input, shape index: {}]
  %s6 = inlined_call_operand.vmem [shape: bf16[512,128], index: 6, kind: input, shape index: {}]
  %s7 = inlined_call_operand.vmem [shape: f32[1,128], index: 7, kind: input, shape index: {}]
  %s8 = inlined_call_operand.vmem [shape: bf16[32,128], index: 8, kind: input, shape index: {}]
  %s9 = inlined_call_operand.vmem [shape: bf16[32,128], index: 9, kind: input, shape index: {}]
  %s10 = inlined_call_operand.vmem [shape: bf16[32,128], index: 10, kind: input, shape index: {}]
  %s11 = inlined_call_operand.vmem [shape: f32[1,128], index: 11, kind: input, shape index: {}]
  %s12 = inlined_call_operand.vmem [shape: bf16[32,8], index: 12, kind: input, shape index: {}]
  %s13 = inlined_call_operand.vmem [shape: f32[1,8], index: 13, kind: input, shape index: {}]
  %s14 = inlined_call_operand.hbm [shape: f32[4,8], index: 14, kind: output, shape index: {}]
  %s15 = sld [smem:[#allocation0]]
  $region66: #{cnn_lstm_forward.1} parent=0
    _
  %s17 = ssub.s32 1, %s15
  %s18 = scalar_select 0, %s17, %s15
  $region1: #{cnn_lstm_forward.1} parent=0
    #allocation3 [shape = 'u8[2048]{0}', space=vmem, size = 0x800, scoped, tag = 'output window, operand 0, single buffered']
    #allocation4 [shape = 's32[1]{0}', space=sflag, size = 0x4, scoped, tag = 'scoped memory for cnn_lstm_forward.1']
    %19 = vsyncpa [#allocation4], 0
    // Predicated region
    $region2: #{cnn_lstm_forward.1} parent=1 // pred_check
      _
    $region3: #{cnn_lstm_forward.1} parent=1 // pred_check_branch
      %21 = sbr.rel (0) target = $region5
    $region4: #{cnn_lstm_forward.1} parent=1 // pred_region
      _
    $region5: #{cnn_lstm_forward.1} parent=1 // pred_fallthru
      _
    // Predicated region
    $region6: #{cnn_lstm_forward.1} parent=1 // pred_check
      _
    $region7: #{cnn_lstm_forward.1} parent=1 // pred_check_branch
      %23 = sbr.rel (0) target = $region9
    $region8: #{cnn_lstm_forward.1} parent=1 // pred_region
      _
    $region9: #{cnn_lstm_forward.1} parent=1 // pred_fallthru
      _
    // Predicated region
    $region10: #{cnn_lstm_forward.1} parent=1 // pred_check
      _
    $region11: #{cnn_lstm_forward.1} parent=1 // pred_check_branch
      %25 = sbr.rel (0) target = $region13
    $region12: #{cnn_lstm_forward.1} parent=1 // pred_region
      _
    $region13: #{cnn_lstm_forward.1} parent=1 // pred_fallthru
      _
    // Predicated region
    $region14: #{cnn_lstm_forward.1} parent=1 // pred_check
      _
    $region15: #{cnn_lstm_forward.1} parent=1 // pred_check_branch
      %27 = sbr.rel (0) target = $region17
    $region16: #{cnn_lstm_forward.1} parent=1 // pred_region
      _
    $region17: #{cnn_lstm_forward.1} parent=1 // pred_fallthru
      _
    // Predicated region
    $region18: #{cnn_lstm_forward.1} parent=1 // pred_check
      _
    $region19: #{cnn_lstm_forward.1} parent=1 // pred_check_branch
      %29 = sbr.rel (0) target = $region21
    $region20: #{cnn_lstm_forward.1} parent=1 // pred_region
      _
    $region21: #{cnn_lstm_forward.1} parent=1 // pred_fallthru
      _
    // Predicated region
    $region22: #{cnn_lstm_forward.1} parent=1 // pred_check
      _
    $region23: #{cnn_lstm_forward.1} parent=1 // pred_check_branch
      %31 = sbr.rel (0) target = $region25
    $region24: #{cnn_lstm_forward.1} parent=1 // pred_region
      _
    $region25: #{cnn_lstm_forward.1} parent=1 // pred_fallthru
      _
    // Predicated region
    $region26: #{cnn_lstm_forward.1} parent=1 // pred_check
      _
    $region27: #{cnn_lstm_forward.1} parent=1 // pred_check_branch
      %33 = sbr.rel (0) target = $region29
    $region28: #{cnn_lstm_forward.1} parent=1 // pred_region
      _
    $region29: #{cnn_lstm_forward.1} parent=1 // pred_fallthru
      _
    // Predicated region
    $region30: #{cnn_lstm_forward.1} parent=1 // pred_check
      _
    $region31: #{cnn_lstm_forward.1} parent=1 // pred_check_branch
      %35 = sbr.rel (0) target = $region33
    $region32: #{cnn_lstm_forward.1} parent=1 // pred_region
      _
    $region33: #{cnn_lstm_forward.1} parent=1 // pred_fallthru
      _
    // Predicated region
    $region34: #{cnn_lstm_forward.1} parent=1 // pred_check
      _
    $region35: #{cnn_lstm_forward.1} parent=1 // pred_check_branch
      %37 = sbr.rel (0) target = $region37
    $region36: #{cnn_lstm_forward.1} parent=1 // pred_region
      _
    $region37: #{cnn_lstm_forward.1} parent=1 // pred_fallthru
      _
    // Predicated region
    $region38: #{cnn_lstm_forward.1} parent=1 // pred_check
      _
    $region39: #{cnn_lstm_forward.1} parent=1 // pred_check_branch
      %39 = sbr.rel (0) target = $region41
    $region40: #{cnn_lstm_forward.1} parent=1 // pred_region
      _
    $region41: #{cnn_lstm_forward.1} parent=1 // pred_fallthru
      _
    // Predicated region
    $region42: #{cnn_lstm_forward.1} parent=1 // pred_check
      _
    $region43: #{cnn_lstm_forward.1} parent=1 // pred_check_branch
      %41 = sbr.rel (0) target = $region45
    $region44: #{cnn_lstm_forward.1} parent=1 // pred_region
      _
    $region45: #{cnn_lstm_forward.1} parent=1 // pred_fallthru
      _
    // Predicated region
    $region46: #{cnn_lstm_forward.1} parent=1 // pred_check
      _
    $region47: #{cnn_lstm_forward.1} parent=1 // pred_check_branch
      %43 = sbr.rel (0) target = $region49
    $region48: #{cnn_lstm_forward.1} parent=1 // pred_region
      _
    $region49: #{cnn_lstm_forward.1} parent=1 // pred_fallthru
      _
    // Predicated region
    $region50: #{cnn_lstm_forward.1} parent=1 // pred_check
      _
    $region51: #{cnn_lstm_forward.1} parent=1 // pred_check_branch
      %45 = sbr.rel (0) target = $region53
    $region52: #{cnn_lstm_forward.1} parent=1 // pred_region
      _
    $region53: #{cnn_lstm_forward.1} parent=1 // pred_fallthru
      _
    // Predicated region
    $region54: #{cnn_lstm_forward.1} parent=1 // pred_check
      _
    $region55: #{cnn_lstm_forward.1} parent=1 // pred_check_branch
      %47 = sbr.rel (0) target = $region57
    $region56: #{cnn_lstm_forward.1} parent=1 // pred_region
      _
    $region57: #{cnn_lstm_forward.1} parent=1 // pred_fallthru
      _
    %v49 = vld [vmem:[%s0] sm:$0xff]
    %v50 = vld [vmem:[%s0 + $0x8] sm:$0xff]
    %v51 = vld [vmem:[%s0 + $0x10] sm:$0xff]
    %v52 = vld [vmem:[%s0 + $0x18] sm:$0xff]
    %v53 = vld [vmem:[%s0 + $0x20] sm:$0xff]
    %v54 = vld [vmem:[%s0 + $0x28] sm:$0xff]
    %v55 = vld [vmem:[%s0 + $0x30] sm:$0xff]
    %v56 = vld [vmem:[%s0 + $0x38] sm:$0xff]
    %v57 = vpack.c.bf16 %v50, %v49
    %v58 = vpack.c.bf16 %v52, %v51
    %v59 = vpack.c.bf16 %v54, %v53
    %v60 = vpack.c.bf16 %v56, %v55
    %v61 = vld [vmem:[%s2] sm:$0x7]
    %v62 = vld [vmem:[%s3] sm:$0x1]
    %v64 = vlaneseq
    %v65 = vshrl.u32 %v64, 7
    %v66 = vsub.s32 0, %v65
    %v67 = vrot.slane %v62, %v66
    %vm69 = vcmask 39936
    %v71 = vsel %vm69, %v57, 0
    %v74 = vsel %vm69, %v58, 0
    %v77 = vsel %vm69, %v59, 0
    %v80 = vsel %vm69, %v60, 0
    %vm82 = vcmask 1041408
    %vm83 = vcmask 1042432
    %v84 = vsel %vm82, 4294967295, 65535
    %v85 = vsel %vm83, %v84, 0
    %v87 = vand.u32 %v61, %v85
    %89 = vmatprep.subr.bf16.mxu0 0
    %90 = vmatpush1.bf16.msra.mxu0 %v87
    %91 = vmatprep.subr.bf16.mxu0 0
    %92 = vmatpush1.bf16.msra.mxu0 0
    %93 = vmatprep.subr.bf16.mxu0 0
    %94 = vmatpush1.bf16.msra.mxu0 0
    %95 = vmatprep.subr.bf16.mxu0 0
    %96 = vmatpush1.bf16.msra.mxu0 0
    %97 = vmatprep.subr.bf16.mxu0 0
    %98 = vmatpush1.bf16.msra.mxu0 0
    %99 = vmatprep.subr.bf16.mxu0 0
    %100 = vmatpush1.bf16.msra.mxu0 0
    %101 = vmatprep.subr.bf16.mxu0 0
    %102 = vmatpush1.bf16.msra.mxu0 0
    %103 = vmatprep.subr.bf16.mxu0 0
    %104 = vmatpush1.bf16.msra.mxu0 0
    %105 = vmatprep.subr.bf16.mxu0 0
    %106 = vmatpush1.bf16.msra.mxu0 0
    %107 = vmatprep.subr.bf16.mxu0 0
    %108 = vmatpush1.bf16.msra.mxu0 0
    %109 = vmatprep.subr.bf16.mxu0 0
    %110 = vmatpush1.bf16.msra.mxu0 0
    %111 = vmatprep.subr.bf16.mxu0 0
    %112 = vmatpush1.bf16.msra.mxu0 0
    %113 = vmatprep.subr.bf16.mxu0 0
    %114 = vmatpush1.bf16.msra.mxu0 0
    %115 = vmatprep.subr.bf16.mxu0 0
    %116 = vmatpush1.bf16.msra.mxu0 0
    %117 = vmatprep.subr.bf16.mxu0 0
    %118 = vmatpush1.bf16.msra.mxu0 0
    %119 = vmatprep.subr.bf16.mxu0 0
    %120 = vmatpush1.bf16.msra.mxu0 0
    %121 = vmatprep.mubr.bf16.mxu0 0
    %122 = vmatmul.mubr.bf16.gmra.mrb[0].mxu0 %v71
    %v123 = vpop.f32.mrb[0].mxu0
    %v124 = vadd.f32 %v67, %v123
    %v125 = vpop.f32.mrb[0].mxu0
    %v126 = vpop.f32.mrb[0].mxu0
    %v127 = vadd.f32 %v67, %v126
    %v128 = vpop.f32.mrb[0].mxu0
    %129 = vmatprep.mubr.bf16.mxu0 0
    %130 = vmatmul.mubr.bf16.gmra.mrb[0].mxu0 %v74
    %v131 = vpop.f32.mrb[0].mxu0
    %v132 = vadd.f32 %v67, %v131
    %v133 = vpop.f32.mrb[0].mxu0
    %v134 = vpop.f32.mrb[0].mxu0
    %v135 = vadd.f32 %v67, %v134
    %v136 = vpop.f32.mrb[0].mxu0
    %137 = vmatprep.mubr.bf16.mxu0 0
    %138 = vmatmul.mubr.bf16.gmra.mrb[0].mxu0 %v77
    %v139 = vpop.f32.mrb[0].mxu0
    %v140 = vadd.f32 %v67, %v139
    %v141 = vpop.f32.mrb[0].mxu0
    %v142 = vpop.f32.mrb[0].mxu0
    %v143 = vadd.f32 %v67, %v142
    %v144 = vpop.f32.mrb[0].mxu0
    %145 = vmatprep.mubr.bf16.mxu0 0
    %146 = vmatmul.mubr.bf16.gmra.mrb[0].mxu0 %v80
    %v147 = vpop.f32.mrb[0].mxu0
    %v148 = vadd.f32 %v67, %v147
    %v149 = vpop.f32.mrb[0].mxu0
    %v150 = vpop.f32.mrb[0].mxu0
    %v151 = vadd.f32 %v67, %v150
    %v152 = vpop.f32.mrb[0].mxu0
    %153 = vdwg.mxu0
    %v154 = vmax.f32 %v124, 0.0
    %v155 = vmax.f32 %v127, 0.0
    %v156 = vmax.f32 %v132, 0.0
    %v157 = vmax.f32 %v135, 0.0
    %v158 = vmax.f32 %v140, 0.0
    %v159 = vmax.f32 %v143, 0.0
    %v160 = vmax.f32 %v148, 0.0
    %v161 = vmax.f32 %v151, 0.0
    %v162 = vld [vmem:[%s1] sm:$0xff]
    %v163 = vld [vmem:[%s1 + $0x8] sm:$0xff]
    %v164 = vld [vmem:[%s1 + $0x10] sm:$0xff]
    %v165 = vld [vmem:[%s1 + $0x18] sm:$0xff]
    %v166 = vld [vmem:[%s1 + $0x20] sm:$0xff]
    %v167 = vld [vmem:[%s1 + $0x28] sm:$0xff]
    %v168 = vld [vmem:[%s1 + $0x30] sm:$0xff]
    %v169 = vld [vmem:[%s1 + $0x38] sm:$0xff]
    %v170 = vmul.f32 %v154, %v162
    %v171 = vmul.f32 %v155, %v163
    %v172 = vmul.f32 %v156, %v164
    %v173 = vmul.f32 %v157, %v165
    %v174 = vmul.f32 %v158, %v166
    %v175 = vmul.f32 %v159, %v167
    %v176 = vmul.f32 %v160, %v168
    %v177 = vmul.f32 %v161, %v169
    %v178 = vpack.c.bf16 %v171, %v170
    %v179 = vpack.c.bf16 %v173, %v172
    %v180 = vpack.c.bf16 %v175, %v174
    %v181 = vpack.c.bf16 %v177, %v176
    %v182 = vld [vmem:[%s4] sm:$0xf]
    %v183 = vld [vmem:[%s4 + $0x4] sm:$0xf]
    %v184 = vld [vmem:[%s4 + $0x8] sm:$0xf]
    %v185 = vld [vmem:[%s4 + $0xc] sm:$0xf]
    %v186 = vld [vmem:[%s4 + $0x10] sm:$0xf]
    %v187 = vld [vmem:[%s4 + $0x14] sm:$0xf]
    %v188 = vld [vmem:[%s4 + $0x18] sm:$0xf]
    %v189 = vld [vmem:[%s4 + $0x1c] sm:$0xf]
    %v190 = vld [vmem:[%s4 + $0x20] sm:$0xf]
    %v191 = vld [vmem:[%s4 + $0x24] sm:$0xf]
    %v192 = vld [vmem:[%s4 + $0x28] sm:$0xf]
    %v193 = vld [vmem:[%s4 + $0x2c] sm:$0xf]
    %v194 = vld [vmem:[%s5] sm:$0x1]
    %v196 = vlaneseq
    %v197 = vshrl.u32 %v196, 7
    %v198 = vsub.s32 0, %v197
    %v199 = vrot.slane %v194, %v198
    %v213 = vunpack.c.l.b16 %v182
    %v214 = vunpack.c.l.b16 %v183
    %v215 = vunpack.c.l.b16 %v184
    %v216 = vunpack.c.l.b16 %v185
    %v217 = vunpack.c.l.b16 %v186
    %v218 = vunpack.c.l.b16 %v187
    %v219 = vunpack.c.l.b16 %v188
    %v220 = vunpack.c.l.b16 %v189
    %v221 = vunpack.c.l.b16 %v190
    %v222 = vunpack.c.l.b16 %v191
    %v223 = vunpack.c.l.b16 %v192
    %v224 = vunpack.c.l.b16 %v193
    %v225 = vpack.c.b16 %v214, %v213
    %v226 = vpack.c.b16 %v216, %v215
    %v227 = vpack.c.b16 %v218, %v217
    %v228 = vpack.c.b16 %v220, %v219
    %v229 = vpack.c.b16 %v222, %v221
    %v230 = vpack.c.b16 %v224, %v223
    %vm237 = vcmask 785408
    %v239 = vsel %vm237, %v178, 0
    %v242 = vsel %vm237, %v179, 0
    %v245 = vsel %vm237, %v180, 0
    %v248 = vsel %vm237, %v181, 0
    %250 = vmatprep.subr.bf16.mxu0 0
    %251 = vmatpush1.bf16.msra.mxu0 %v225
    %252 = vmatprep.subr.bf16.mxu0 0
    %253 = vmatpush1.bf16.msra.mxu0 %v226
    %254 = vmatprep.subr.bf16.mxu0 0
    %255 = vmatpush1.bf16.msra.mxu0 %v227
    %256 = vmatprep.subr.bf16.mxu0 0
    %257 = vmatpush1.bf16.msra.mxu0 %v228
    %258 = vmatprep.subr.bf16.mxu0 0
    %259 = vmatpush1.bf16.msra.mxu0 %v229
    %260 = vmatprep.subr.bf16.mxu0 0
    %261 = vmatpush1.bf16.msra.mxu0 %v230
    %262 = vmatprep.subr.bf16.mxu0 0
    %263 = vmatpush1.bf16.msra.mxu0 0
    %264 = vmatprep.subr.bf16.mxu0 0
    %265 = vmatpush1.bf16.msra.mxu0 0
    %266 = vmatprep.subr.bf16.mxu0 0
    %267 = vmatpush1.bf16.msra.mxu0 0
    %268 = vmatprep.subr.bf16.mxu0 0
    %269 = vmatpush1.bf16.msra.mxu0 0
    %270 = vmatprep.subr.bf16.mxu0 0
    %271 = vmatpush1.bf16.msra.mxu0 0
    %272 = vmatprep.subr.bf16.mxu0 0
    %273 = vmatpush1.bf16.msra.mxu0 0
    %274 = vmatprep.subr.bf16.mxu0 0
    %275 = vmatpush1.bf16.msra.mxu0 0
    %276 = vmatprep.subr.bf16.mxu0 0
    %277 = vmatpush1.bf16.msra.mxu0 0
    %278 = vmatprep.subr.bf16.mxu0 0
    %279 = vmatpush1.bf16.msra.mxu0 0
    %280 = vmatprep.subr.bf16.mxu0 0
    %281 = vmatpush1.bf16.msra.mxu0 0
    %282 = vmatprep.mubr.bf16.mxu0 0
    %283 = vmatmul.mubr.bf16.gmra.mrb[0].mxu0 %v239
    %v284 = vpop.f32.mrb[0].mxu0
    %v285 = vadd.f32 %v199, %v284
    %v286 = vpop.f32.mrb[0].mxu0
    %v287 = vpop.f32.mrb[0].mxu0
    %v288 = vadd.f32 %v199, %v287
    %v289 = vpop.f32.mrb[0].mxu0
    %290 = vmatprep.mubr.bf16.mxu0 0
    %291 = vmatmul.mubr.bf16.gmra.mrb[0].mxu0 %v242
    %v292 = vpop.f32.mrb[0].mxu0
    %v293 = vadd.f32 %v199, %v292
    %v294 = vpop.f32.mrb[0].mxu0
    %v295 = vpop.f32.mrb[0].mxu0
    %v296 = vadd.f32 %v199, %v295
    %v297 = vpop.f32.mrb[0].mxu0
    %298 = vmatprep.mubr.bf16.mxu0 0
    %299 = vmatmul.mubr.bf16.gmra.mrb[0].mxu0 %v245
    %v300 = vpop.f32.mrb[0].mxu0
    %v301 = vadd.f32 %v199, %v300
    %v302 = vpop.f32.mrb[0].mxu0
    %v303 = vpop.f32.mrb[0].mxu0
    %v304 = vadd.f32 %v199, %v303
    %v305 = vpop.f32.mrb[0].mxu0
    %306 = vmatprep.mubr.bf16.mxu0 0
    %307 = vmatmul.mubr.bf16.gmra.mrb[0].mxu0 %v248
    %v308 = vpop.f32.mrb[0].mxu0
    %v309 = vadd.f32 %v199, %v308
    %v310 = vpop.f32.mrb[0].mxu0
    %v311 = vpop.f32.mrb[0].mxu0
    %v312 = vadd.f32 %v199, %v311
    %v313 = vpop.f32.mrb[0].mxu0
    %314 = vdwg.mxu0
    %v315 = vmax.f32 %v285, 0.0
    %v316 = vmax.f32 %v288, 0.0
    %v317 = vmax.f32 %v293, 0.0
    %v318 = vmax.f32 %v296, 0.0
    %v319 = vmax.f32 %v301, 0.0
    %v320 = vmax.f32 %v304, 0.0
    %v321 = vmax.f32 %v309, 0.0
    %v322 = vmax.f32 %v312, 0.0
    %vm323 = vcmask 257024
    %324 = vst.msk [vmem:[#allocation2] sm:$0xf] %vm323, %v315
    %v326 = vcombine.high %v315, %v315
    %327 = vrot.lane.b32.xlu0 %v326, 32
    %v328 = vpop.permute.xlu0 %327
    %vm330 = vcmask 519424
    %331 = vst.msk [vmem:[#allocation2] sm:$0xf] %vm330, %v328
    %333 = vrot.lane.b32.xlu0 %v316, 64
    %v334 = vpop.permute.xlu0 %333
    %vm336 = vcmask 781824
    %337 = vst.msk [vmem:[#allocation2] sm:$0xf] %vm336, %v334
    %v338 = vcombine.high %v316, %v316
    %339 = vrot.lane.b32.xlu0 %v338, 96
    %v340 = vpop.permute.xlu0 %339
    %vm342 = vcmask 1044224
    %343 = vst.msk [vmem:[#allocation2] sm:$0xf] %vm342, %v340
    %344 = vst.msk [vmem:[#allocation2 + $0x4] sm:$0xf] %vm323, %v317
    %v346 = vcombine.high %v317, %v317
    %347 = vrot.lane.b32.xlu0 %v346, 32
    %v348 = vpop.permute.xlu0 %347
    %350 = vst.msk [vmem:[#allocation2 + $0x4] sm:$0xf] %vm330, %v348
    %352 = vrot.lane.b32.xlu0 %v318, 64
    %v353 = vpop.permute.xlu0 %352
    %355 = vst.msk [vmem:[#allocation2 + $0x4] sm:$0xf] %vm336, %v353
    %v356 = vcombine.high %v318, %v318
    %357 = vrot.lane.b32.xlu0 %v356, 96
    %v358 = vpop.permute.xlu0 %357
    %360 = vst.msk [vmem:[#allocation2 + $0x4] sm:$0xf] %vm342, %v358
    %361 = vst.msk [vmem:[#allocation2 + $0x8] sm:$0xf] %vm323, %v319
    %v363 = vcombine.high %v319, %v319
    %364 = vrot.lane.b32.xlu0 %v363, 32
    %v365 = vpop.permute.xlu0 %364
    %367 = vst.msk [vmem:[#allocation2 + $0x8] sm:$0xf] %vm330, %v365
    %369 = vrot.lane.b32.xlu0 %v320, 64
    %v370 = vpop.permute.xlu0 %369
    %372 = vst.msk [vmem:[#allocation2 + $0x8] sm:$0xf] %vm336, %v370
    %v373 = vcombine.high %v320, %v320
    %374 = vrot.lane.b32.xlu0 %v373, 96
    %v375 = vpop.permute.xlu0 %374
    %377 = vst.msk [vmem:[#allocation2 + $0x8] sm:$0xf] %vm342, %v375
    %378 = vst.msk [vmem:[#allocation2 + $0xc] sm:$0xf] %vm323, %v321
    %v380 = vcombine.high %v321, %v321
    %381 = vrot.lane.b32.xlu0 %v380, 32
    %v382 = vpop.permute.xlu0 %381
    %384 = vst.msk [vmem:[#allocation2 + $0xc] sm:$0xf] %vm330, %v382
    %386 = vrot.lane.b32.xlu0 %v322, 64
    %v387 = vpop.permute.xlu0 %386
    %389 = vst.msk [vmem:[#allocation2 + $0xc] sm:$0xf] %vm336, %v387
    %v390 = vcombine.high %v322, %v322
    %391 = vrot.lane.b32.xlu0 %v390, 96
    %v392 = vpop.permute.xlu0 %391
    %394 = vst.msk [vmem:[#allocation2 + $0xc] sm:$0xf] %vm342, %v392
    %v395 = vld [vmem:[#allocation2] sm:$0xff]
    %v396 = vld [vmem:[#allocation2 + $0x8] sm:$0xff]
    %v399 = vcombine.high %v395, %v395
    %v400 = vcombine.high %v396, %v396
    %v403 = vpack.c.bf16 %v395, %v395
    %v404 = vpack.c.bf16 %v399, %v399
    %v405 = vpack.c.bf16 %v396, %v396
    %v406 = vpack.c.bf16 %v400, %v400
    %v407 = vld [vmem:[%s6] sm:$0xf]
    %v408 = vld [vmem:[%s6 + $0x4] sm:$0xf]
    %v409 = vld [vmem:[%s6 + $0x8] sm:$0xf]
    %v410 = vld [vmem:[%s6 + $0xc] sm:$0xf]
    %v411 = vld [vmem:[%s6 + $0x10] sm:$0xf]
    %v412 = vld [vmem:[%s6 + $0x14] sm:$0xf]
    %v413 = vld [vmem:[%s6 + $0x18] sm:$0xf]
    %v414 = vld [vmem:[%s6 + $0x1c] sm:$0xf]
    %v415 = vld [vmem:[%s6 + $0x20] sm:$0xf]
    %v416 = vld [vmem:[%s6 + $0x24] sm:$0xf]
    %v417 = vld [vmem:[%s6 + $0x28] sm:$0xf]
    %v418 = vld [vmem:[%s6 + $0x2c] sm:$0xf]
    %v419 = vld [vmem:[%s6 + $0x30] sm:$0xf]
    %v420 = vld [vmem:[%s6 + $0x34] sm:$0xf]
    %v421 = vld [vmem:[%s6 + $0x38] sm:$0xf]
    %v422 = vld [vmem:[%s6 + $0x3c] sm:$0xf]
    %v423 = vld [vmem:[%s6 + $0x40] sm:$0xf]
    %v424 = vld [vmem:[%s6 + $0x44] sm:$0xf]
    %v425 = vld [vmem:[%s6 + $0x48] sm:$0xf]
    %v426 = vld [vmem:[%s6 + $0x4c] sm:$0xf]
    %v427 = vld [vmem:[%s6 + $0x50] sm:$0xf]
    %v428 = vld [vmem:[%s6 + $0x54] sm:$0xf]
    %v429 = vld [vmem:[%s6 + $0x58] sm:$0xf]
    %v430 = vld [vmem:[%s6 + $0x5c] sm:$0xf]
    %v431 = vld [vmem:[%s6 + $0x60] sm:$0xf]
    %v432 = vld [vmem:[%s6 + $0x64] sm:$0xf]
    %v433 = vld [vmem:[%s6 + $0x68] sm:$0xf]
    %v434 = vld [vmem:[%s6 + $0x6c] sm:$0xf]
    %v435 = vld [vmem:[%s6 + $0x70] sm:$0xf]
    %v436 = vld [vmem:[%s6 + $0x74] sm:$0xf]
    %v437 = vld [vmem:[%s6 + $0x78] sm:$0xf]
    %v438 = vld [vmem:[%s6 + $0x7c] sm:$0xf]
    %v439 = vld [vmem:[%s6 + $0x80] sm:$0xf]
    %v440 = vld [vmem:[%s6 + $0x84] sm:$0xf]
    %v441 = vld [vmem:[%s6 + $0x88] sm:$0xf]
    %v442 = vld [vmem:[%s6 + $0x8c] sm:$0xf]
    %v443 = vld [vmem:[%s6 + $0x90] sm:$0xf]
    %v444 = vld [vmem:[%s6 + $0x94] sm:$0xf]
    %v445 = vld [vmem:[%s6 + $0x98] sm:$0xf]
    %v446 = vld [vmem:[%s6 + $0x9c] sm:$0xf]
    %v447 = vld [vmem:[%s6 + $0xa0] sm:$0xf]
    %v448 = vld [vmem:[%s6 + $0xa4] sm:$0xf]
    %v449 = vld [vmem:[%s6 + $0xa8] sm:$0xf]
    %v450 = vld [vmem:[%s6 + $0xac] sm:$0xf]
    %v451 = vld [vmem:[%s6 + $0xb0] sm:$0xf]
    %v452 = vld [vmem:[%s6 + $0xb4] sm:$0xf]
    %v453 = vld [vmem:[%s6 + $0xb8] sm:$0xf]
    %v454 = vld [vmem:[%s6 + $0xbc] sm:$0xf]
    %v455 = vld [vmem:[%s6 + $0xc0] sm:$0xf]
    %v456 = vld [vmem:[%s6 + $0xc4] sm:$0xf]
    %v457 = vld [vmem:[%s6 + $0xc8] sm:$0xf]
    %v458 = vld [vmem:[%s6 + $0xcc] sm:$0xf]
    %v459 = vld [vmem:[%s6 + $0xd0] sm:$0xf]
    %v460 = vld [vmem:[%s6 + $0xd4] sm:$0xf]
    %v461 = vld [vmem:[%s6 + $0xd8] sm:$0xf]
    %v462 = vld [vmem:[%s6 + $0xdc] sm:$0xf]
    %v463 = vld [vmem:[%s6 + $0xe0] sm:$0xf]
    %v464 = vld [vmem:[%s6 + $0xe4] sm:$0xf]
    %v465 = vld [vmem:[%s6 + $0xe8] sm:$0xf]
    %v466 = vld [vmem:[%s6 + $0xec] sm:$0xf]
    %v467 = vld [vmem:[%s6 + $0xf0] sm:$0xf]
    %v468 = vld [vmem:[%s6 + $0xf4] sm:$0xf]
    %v469 = vld [vmem:[%s6 + $0xf8] sm:$0xf]
    %v470 = vld [vmem:[%s6 + $0xfc] sm:$0xf]
    %v471 = vld [vmem:[%s7] sm:$0x1]
    %v473 = vlaneseq
    %v474 = vshrl.u32 %v473, 7
    %v475 = vsub.s32 0, %v474
    %v476 = vrot.slane %v471, %v475
    %v542 = vunpack.c.l.b16 %v407
    %v543 = vunpack.c.l.b16 %v408
    %v544 = vunpack.c.l.b16 %v409
    %v545 = vunpack.c.l.b16 %v410
    %v546 = vunpack.c.l.b16 %v411
    %v547 = vunpack.c.l.b16 %v412
    %v548 = vunpack.c.l.b16 %v413
    %v549 = vunpack.c.l.b16 %v414
    %v550 = vunpack.c.l.b16 %v415
    %v551 = vunpack.c.l.b16 %v416
    %v552 = vunpack.c.l.b16 %v417
    %v553 = vunpack.c.l.b16 %v418
    %v554 = vunpack.c.l.b16 %v419
    %v555 = vunpack.c.l.b16 %v420
    %v556 = vunpack.c.l.b16 %v421
    %v557 = vunpack.c.l.b16 %v422
    %v558 = vunpack.c.l.b16 %v423
    %v559 = vunpack.c.l.b16 %v424
    %v560 = vunpack.c.l.b16 %v425
    %v561 = vunpack.c.l.b16 %v426
    %v562 = vunpack.c.l.b16 %v427
    %v563 = vunpack.c.l.b16 %v428
    %v564 = vunpack.c.l.b16 %v429
    %v565 = vunpack.c.l.b16 %v430
    %v566 = vunpack.c.l.b16 %v431
    %v567 = vunpack.c.l.b16 %v432
    %v568 = vunpack.c.l.b16 %v433
    %v569 = vunpack.c.l.b16 %v434
    %v570 = vunpack.c.l.b16 %v435
    %v571 = vunpack.c.l.b16 %v436
    %v572 = vunpack.c.l.b16 %v437
    %v573 = vunpack.c.l.b16 %v438
    %v574 = vunpack.c.l.b16 %v439
    %v575 = vunpack.c.l.b16 %v440
    %v576 = vunpack.c.l.b16 %v441
    %v577 = vunpack.c.l.b16 %v442
    %v578 = vunpack.c.l.b16 %v443
    %v579 = vunpack.c.l.b16 %v444
    %v580 = vunpack.c.l.b16 %v445
    %v581 = vunpack.c.l.b16 %v446
    %v582 = vunpack.c.l.b16 %v447
    %v583 = vunpack.c.l.b16 %v448
    %v584 = vunpack.c.l.b16 %v449
    %v585 = vunpack.c.l.b16 %v450
    %v586 = vunpack.c.l.b16 %v451
    %v587 = vunpack.c.l.b16 %v452
    %v588 = vunpack.c.l.b16 %v453
    %v589 = vunpack.c.l.b16 %v454
    %v590 = vunpack.c.l.b16 %v455
    %v591 = vunpack.c.l.b16 %v456
    %v592 = vunpack.c.l.b16 %v457
    %v593 = vunpack.c.l.b16 %v458
    %v594 = vunpack.c.l.b16 %v459
    %v595 = vunpack.c.l.b16 %v460
    %v596 = vunpack.c.l.b16 %v461
    %v597 = vunpack.c.l.b16 %v462
    %v598 = vunpack.c.l.b16 %v463
    %v599 = vunpack.c.l.b16 %v464
    %v600 = vunpack.c.l.b16 %v465
    %v601 = vunpack.c.l.b16 %v466
    %v602 = vunpack.c.l.b16 %v467
    %v603 = vunpack.c.l.b16 %v468
    %v604 = vunpack.c.l.b16 %v469
    %v605 = vunpack.c.l.b16 %v470
    %v606 = vpack.c.b16 %v543, %v542
    %v607 = vpack.c.b16 %v545, %v544
    %v608 = vpack.c.b16 %v547, %v546
    %v609 = vpack.c.b16 %v549, %v548
    %v610 = vpack.c.b16 %v551, %v550
    %v611 = vpack.c.b16 %v553, %v552
    %v612 = vpack.c.b16 %v555, %v554
    %v613 = vpack.c.b16 %v557, %v556
    %v614 = vpack.c.b16 %v559, %v558
    %v615 = vpack.c.b16 %v561, %v560
    %v616 = vpack.c.b16 %v563, %v562
    %v617 = vpack.c.b16 %v565, %v564
    %v618 = vpack.c.b16 %v567, %v566
    %v619 = vpack.c.b16 %v569, %v568
    %v620 = vpack.c.b16 %v571, %v570
    %v621 = vpack.c.b16 %v573, %v572
    %v622 = vpack.c.b16 %v575, %v574
    %v623 = vpack.c.b16 %v577, %v576
    %v624 = vpack.c.b16 %v579, %v578
    %v625 = vpack.c.b16 %v581, %v580
    %v626 = vpack.c.b16 %v583, %v582
    %v627 = vpack.c.b16 %v585, %v584
    %v628 = vpack.c.b16 %v587, %v586
    %v629 = vpack.c.b16 %v589, %v588
    %v630 = vpack.c.b16 %v591, %v590
    %v631 = vpack.c.b16 %v593, %v592
    %v632 = vpack.c.b16 %v595, %v594
    %v633 = vpack.c.b16 %v597, %v596
    %v634 = vpack.c.b16 %v599, %v598
    %v635 = vpack.c.b16 %v601, %v600
    %v636 = vpack.c.b16 %v603, %v602
    %v637 = vpack.c.b16 %v605, %v604
    %670 = vmatprep.subr.bf16.mxu0 0
    %671 = vmatpush1.bf16.msra.mxu0 %v606
    %672 = vmatprep.subr.bf16.mxu0 0
    %673 = vmatpush1.bf16.msra.mxu0 %v607
    %674 = vmatprep.subr.bf16.mxu0 0
    %675 = vmatpush1.bf16.msra.mxu0 %v608
    %676 = vmatprep.subr.bf16.mxu0 0
    %677 = vmatpush1.bf16.msra.mxu0 %v609
    %678 = vmatprep.subr.bf16.mxu0 0
    %679 = vmatpush1.bf16.msra.mxu0 %v610
    %680 = vmatprep.subr.bf16.mxu0 0
    %681 = vmatpush1.bf16.msra.mxu0 %v611
    %682 = vmatprep.subr.bf16.mxu0 0
    %683 = vmatpush1.bf16.msra.mxu0 %v612
    %684 = vmatprep.subr.bf16.mxu0 0
    %685 = vmatpush1.bf16.msra.mxu0 %v613
    %686 = vmatprep.subr.bf16.mxu0 0
    %687 = vmatpush1.bf16.msra.mxu0 %v614
    %688 = vmatprep.subr.bf16.mxu0 0
    %689 = vmatpush1.bf16.msra.mxu0 %v615
    %690 = vmatprep.subr.bf16.mxu0 0
    %691 = vmatpush1.bf16.msra.mxu0 %v616
    %692 = vmatprep.subr.bf16.mxu0 0
    %693 = vmatpush1.bf16.msra.mxu0 %v617
    %694 = vmatprep.subr.bf16.mxu0 0
    %695 = vmatpush1.bf16.msra.mxu0 %v618
    %696 = vmatprep.subr.bf16.mxu0 0
    %697 = vmatpush1.bf16.msra.mxu0 %v619
    %698 = vmatprep.subr.bf16.mxu0 0
    %699 = vmatpush1.bf16.msra.mxu0 %v620
    %700 = vmatprep.subr.bf16.mxu0 0
    %701 = vmatpush1.bf16.msra.mxu0 %v621
    %702 = vmatprep.mubr.bf16.mxu0 %v404
    %703 = vmatmul.mubr.bf16.gmra.mrb[0].mxu0 %v403
    %v704 = vpop.f32.mrb[0].mxu0
    %v705 = vadd.f32 %v476, %v704
    %v706 = vpop.f32.mrb[0].mxu0
    %v707 = vpop.f32.mrb[0].mxu0
    %v708 = vpop.f32.mrb[0].mxu0
    %709 = vdwg.mxu0
    %710 = vmatprep.subr.bf16.mxu0 0
    %711 = vmatpush1.bf16.msra.mxu0 %v622
    %712 = vmatprep.subr.bf16.mxu0 0
    %713 = vmatpush1.bf16.msra.mxu0 %v623
    %714 = vmatprep.subr.bf16.mxu0 0
    %715 = vmatpush1.bf16.msra.mxu0 %v624
    %716 = vmatprep.subr.bf16.mxu0 0
    %717 = vmatpush1.bf16.msra.mxu0 %v625
    %718 = vmatprep.subr.bf16.mxu0 0
    %719 = vmatpush1.bf16.msra.mxu0 %v626
    %720 = vmatprep.subr.bf16.mxu0 0
    %721 = vmatpush1.bf16.msra.mxu0 %v627
    %722 = vmatprep.subr.bf16.mxu0 0
    %723 = vmatpush1.bf16.msra.mxu0 %v628
    %724 = vmatprep.subr.bf16.mxu0 0
    %725 = vmatpush1.bf16.msra.mxu0 %v629
    %726 = vmatprep.subr.bf16.mxu0 0
    %727 = vmatpush1.bf16.msra.mxu0 %v630
    %728 = vmatprep.subr.bf16.mxu0 0
    %729 = vmatpush1.bf16.msra.mxu0 %v631
    %730 = vmatprep.subr.bf16.mxu0 0
    %731 = vmatpush1.bf16.msra.mxu0 %v632
    %732 = vmatprep.subr.bf16.mxu0 0
    %733 = vmatpush1.bf16.msra.mxu0 %v633
    %734 = vmatprep.subr.bf16.mxu0 0
    %735 = vmatpush1.bf16.msra.mxu0 %v634
    %736 = vmatprep.subr.bf16.mxu0 0
    %737 = vmatpush1.bf16.msra.mxu0 %v635
    %738 = vmatprep.subr.bf16.mxu0 0
    %739 = vmatpush1.bf16.msra.mxu0 %v636
    %740 = vmatprep.subr.bf16.mxu0 0
    %741 = vmatpush1.bf16.msra.mxu0 %v637
    %742 = vmatprep.mubr.bf16.mxu0 %v406
    %743 = vmatmul.mubr.bf16.gmra.mrb[0].mxu0 %v405
    %v744 = vpop.f32.mrb[0].mxu0
    %v745 = vadd.f32 %v705, %v744
    %v746 = vpop.f32.mrb[0].mxu0
    %v747 = vpop.f32.mrb[0].mxu0
    %v748 = vpop.f32.mrb[0].mxu0
    %749 = vdwg.mxu0
    %v750 = vld [vmem:[%s8] sm:$0xf]
    %v751 = vld [vmem:[%s8 + $0x4] sm:$0xf]
    %v752 = vld [vmem:[%s8 + $0x8] sm:$0xf]
    %v753 = vld [vmem:[%s8 + $0xc] sm:$0xf]
    %v754 = vld [vmem:[%s9] sm:$0xf]
    %v755 = vld [vmem:[%s9 + $0x4] sm:$0xf]
    %v756 = vld [vmem:[%s9 + $0x8] sm:$0xf]
    %v757 = vld [vmem:[%s9 + $0xc] sm:$0xf]
    %v758 = vld [vmem:[%s10] sm:$0xf]
    %v759 = vld [vmem:[%s10 + $0x4] sm:$0xf]
    %v760 = vld [vmem:[%s10 + $0x8] sm:$0xf]
    %v761 = vld [vmem:[%s10 + $0xc] sm:$0xf]
    %v762 = vld [vmem:[%s11] sm:$0x1]
    %v763 = vlaneseq
    %v764 = vshrl.u32 %v763, 7
    %v769 = vunpack.c.l.b16 %v758
    %v770 = vunpack.c.l.b16 %v759
    %v771 = vunpack.c.l.b16 %v760
    %v772 = vunpack.c.l.b16 %v761
    %v773 = vpack.c.b16 %v770, %v769
    %v774 = vpack.c.b16 %v772, %v771
    %vm777 = vcmask 261120
    %v779 = vsel %vm777, 0, 0
    %781 = vmatprep.subr.bf16.mxu0 0
    %782 = vmatpush1.bf16.msra.mxu0 %v773
    %783 = vmatprep.subr.bf16.mxu0 0
    %784 = vmatpush1.bf16.msra.mxu0 %v774
    %785 = vmatprep.subr.bf16.mxu0 0
    %786 = vmatpush1.bf16.msra.mxu0 0
    %787 = vmatprep.subr.bf16.mxu0 0
    %788 = vmatpush1.bf16.msra.mxu0 0
    %789 = vmatprep.subr.bf16.mxu0 0
    %790 = vmatpush1.bf16.msra.mxu0 0
    %791 = vmatprep.subr.bf16.mxu0 0
    %792 = vmatpush1.bf16.msra.mxu0 0
    %793 = vmatprep.subr.bf16.mxu0 0
    %794 = vmatpush1.bf16.msra.mxu0 0
    %795 = vmatprep.subr.bf16.mxu0 0
    %796 = vmatpush1.bf16.msra.mxu0 0
    %797 = vmatprep.subr.bf16.mxu0 0
    %798 = vmatpush1.bf16.msra.mxu0 0
    %799 = vmatprep.subr.bf16.mxu0 0
    %800 = vmatpush1.bf16.msra.mxu0 0
    %801 = vmatprep.subr.bf16.mxu0 0
    %802 = vmatpush1.bf16.msra.mxu0 0
    %803 = vmatprep.subr.bf16.mxu0 0
    %804 = vmatpush1.bf16.msra.mxu0 0
    %805 = vmatprep.subr.bf16.mxu0 0
    %806 = vmatpush1.bf16.msra.mxu0 0
    %807 = vmatprep.subr.bf16.mxu0 0
    %808 = vmatpush1.bf16.msra.mxu0 0
    %809 = vmatprep.subr.bf16.mxu0 0
    %810 = vmatpush1.bf16.msra.mxu0 0
    %811 = vmatprep.subr.bf16.mxu0 0
    %812 = vmatpush1.bf16.msra.mxu0 0
    %813 = vmatprep.mubr.bf16.mxu0 0
    %814 = vmatmul.mubr.bf16.gmra.mrb[0].mxu0 %v779
    %v815 = vpop.f32.mrb[0].mxu0
    %v816 = vadd.f32 %v762, %v815
    %v817 = vpop.f32.mrb[0].mxu0
    %v818 = vpop.f32.mrb[0].mxu0
    %v819 = vpop.f32.mrb[0].mxu0
    %820 = vdwg.mxu0
    %v825 = vunpack.c.l.b16 %v750
    %v826 = vunpack.c.l.b16 %v751
    %v827 = vunpack.c.l.b16 %v752
    %v828 = vunpack.c.l.b16 %v753
    %v829 = vpack.c.b16 %v826, %v825
    %v830 = vpack.c.b16 %v828, %v827
    %833 = vmatprep.subr.bf16.mxu0 0
    %834 = vmatpush1.bf16.msra.mxu0 %v829
    %835 = vmatprep.subr.bf16.mxu0 0
    %836 = vmatpush1.bf16.msra.mxu0 %v830
    %837 = vmatprep.subr.bf16.mxu0 0
    %838 = vmatpush1.bf16.msra.mxu0 0
    %839 = vmatprep.subr.bf16.mxu0 0
    %840 = vmatpush1.bf16.msra.mxu0 0
    %841 = vmatprep.subr.bf16.mxu0 0
    %842 = vmatpush1.bf16.msra.mxu0 0
    %843 = vmatprep.subr.bf16.mxu0 0
    %844 = vmatpush1.bf16.msra.mxu0 0
    %845 = vmatprep.subr.bf16.mxu0 0
    %846 = vmatpush1.bf16.msra.mxu0 0
    %847 = vmatprep.subr.bf16.mxu0 0
    %848 = vmatpush1.bf16.msra.mxu0 0
    %849 = vmatprep.subr.bf16.mxu0 0
    %850 = vmatpush1.bf16.msra.mxu0 0
    %851 = vmatprep.subr.bf16.mxu0 0
    %852 = vmatpush1.bf16.msra.mxu0 0
    %853 = vmatprep.subr.bf16.mxu0 0
    %854 = vmatpush1.bf16.msra.mxu0 0
    %855 = vmatprep.subr.bf16.mxu0 0
    %856 = vmatpush1.bf16.msra.mxu0 0
    %857 = vmatprep.subr.bf16.mxu0 0
    %858 = vmatpush1.bf16.msra.mxu0 0
    %859 = vmatprep.subr.bf16.mxu0 0
    %860 = vmatpush1.bf16.msra.mxu0 0
    %861 = vmatprep.subr.bf16.mxu0 0
    %862 = vmatpush1.bf16.msra.mxu0 0
    %863 = vmatprep.subr.bf16.mxu0 0
    %864 = vmatpush1.bf16.msra.mxu0 0
    %865 = vmatprep.mubr.bf16.mxu0 0
    %866 = vmatmul.mubr.bf16.gmra.mrb[0].mxu0 %v779
    %v867 = vpop.f32.mrb[0].mxu0
    %v868 = vadd.f32 0.0, %v867
    %v869 = vpop.f32.mrb[0].mxu0
    %v870 = vpop.f32.mrb[0].mxu0
    %v871 = vpop.f32.mrb[0].mxu0
    %872 = vdwg.mxu0
    %v873 = vadd.f32 %v745, %v868
    %v874 = vxor.u32 %v873, 2147483648
    %v875 = vmul.f32 %v874, 1.442695
    %v876 = vpow.pop %v875
    %v877 = vadd.f32 %v876, 1.0
    %v878 = vrcp.pop %v877
    %v879 = vmul.f32 1.0, %v878
    %v880 = vtanh.pop %v873
    %v881 = vmul.f32 %v879, 0.0
    %883 = vrot.lane.b32.xlu0 %v880, 64
    %v884 = vpop.permute.xlu0 %883
    %v886 = vmul.f32 %v879, %v884
    %888 = vrot.lane.b32.xlu0 %v886, 32
    %v889 = vpop.permute.xlu0 %888
    %v891 = vadd.f32 %v881, %v889
    %v892 = vtanh.pop %v891
    %894 = vrot.lane.b32.xlu0 %v892, 64
    %v895 = vpop.permute.xlu0 %894
    %v897 = vmul.f32 %v879, %v895
    %v898 = vpack.c.bf16 %v897, %v897
    %900 = vrot.lane.b32.xlu0 %v898, 32
    %v901 = vpop.permute.xlu0 %900
    %v906 = vunpack.c.l.b16 %v754
    %v907 = vunpack.c.l.b16 %v755
    %v908 = vunpack.c.l.b16 %v756
    %v909 = vunpack.c.l.b16 %v757
    %v910 = vpack.c.b16 %v907, %v906
    %v911 = vpack.c.b16 %v909, %v908
    %v915 = vsel %vm777, %v901, 0
    %917 = vmatprep.subr.bf16.mxu0 0
    %918 = vmatpush1.bf16.msra.mxu0 %v910
    %919 = vmatprep.subr.bf16.mxu0 0
    %920 = vmatpush1.bf16.msra.mxu0 %v911
    %921 = vmatprep.subr.bf16.mxu0 0
    %922 = vmatpush1.bf16.msra.mxu0 0
    %923 = vmatprep.subr.bf16.mxu0 0
    %924 = vmatpush1.bf16.msra.mxu0 0
    %925 = vmatprep.subr.bf16.mxu0 0
    %926 = vmatpush1.bf16.msra.mxu0 0
    %927 = vmatprep.subr.bf16.mxu0 0
    %928 = vmatpush1.bf16.msra.mxu0 0
    %929 = vmatprep.subr.bf16.mxu0 0
    %930 = vmatpush1.bf16.msra.mxu0 0
    %931 = vmatprep.subr.bf16.mxu0 0
    %932 = vmatpush1.bf16.msra.mxu0 0
    %933 = vmatprep.subr.bf16.mxu0 0
    %934 = vmatpush1.bf16.msra.mxu0 0
    %935 = vmatprep.subr.bf16.mxu0 0
    %936 = vmatpush1.bf16.msra.mxu0 0
    %937 = vmatprep.subr.bf16.mxu0 0
    %938 = vmatpush1.bf16.msra.mxu0 0
    %939 = vmatprep.subr.bf16.mxu0 0
    %940 = vmatpush1.bf16.msra.mxu0 0
    %941 = vmatprep.subr.bf16.mxu0 0
    %942 = vmatpush1.bf16.msra.mxu0 0
    %943 = vmatprep.subr.bf16.mxu0 0
    %944 = vmatpush1.bf16.msra.mxu0 0
    %945 = vmatprep.subr.bf16.mxu0 0
    %946 = vmatpush1.bf16.msra.mxu0 0
    %947 = vmatprep.subr.bf16.mxu0 0
    %948 = vmatpush1.bf16.msra.mxu0 0
    %949 = vmatprep.mubr.bf16.mxu0 0
    %950 = vmatmul.mubr.bf16.gmra.mrb[0].mxu0 %v915
    %v951 = vpop.f32.mrb[0].mxu0
    %v952 = vadd.f32 %v816, %v951
    %v953 = vpop.f32.mrb[0].mxu0
    %v954 = vpop.f32.mrb[0].mxu0
    %v955 = vpop.f32.mrb[0].mxu0
    %956 = vdwg.mxu0
    %v957 = vxor.u32 %v952, 2147483648
    %v958 = vmul.f32 %v957, 1.442695
    %v959 = vpow.pop %v958
    %v960 = vadd.f32 %v959, 1.0
    %v961 = vrcp.pop %v960
    %v962 = vmul.f32 1.0, %v961
    %v963 = vtanh.pop %v952
    %v964 = vmul.f32 %v962, 0.0
    %966 = vrot.lane.b32.xlu0 %v963, 64
    %v967 = vpop.permute.xlu0 %966
    %v969 = vmul.f32 %v962, %v967
    %971 = vrot.lane.b32.xlu0 %v969, 32
    %v972 = vpop.permute.xlu0 %971
    %v974 = vadd.f32 %v964, %v972
    %v975 = vtanh.pop %v974
    %977 = vrot.lane.b32.xlu0 %v975, 64
    %v978 = vpop.permute.xlu0 %977
    %v980 = vmul.f32 %v962, %v978
    %vm981 = vcmp.eq.s32.totalorder %v764, 0
    %v982 = vsel %vm981, 1, 0
    %v983 = vcvt.s32.f32 %v982
    %v984 = vlaneseq
    %v985 = vshrl.u32 %v984, 7
    %v986 = vsub.s32 0, %v985
    %v987 = vrot.slane %v980, %v986
    %v988 = vmul.f32 %v983, %v987
    %v989 = vadd.f32 %v988, 0.0
    %v990 = vpack.c.bf16 %v980, %v980
    %992 = vrot.lane.b32.xlu0 %v990, 32
    %v993 = vpop.permute.xlu0 %992
    %v995 = vsel %vm777, %v993, 0
    %997 = vmatprep.subr.bf16.mxu0 0
    %998 = vmatpush1.bf16.msra.mxu0 %v773
    %999 = vmatprep.subr.bf16.mxu0 0
    %1000 = vmatpush1.bf16.msra.mxu0 %v774
    %1001 = vmatprep.subr.bf16.mxu0 0
    %1002 = vmatpush1.bf16.msra.mxu0 0
    %1003 = vmatprep.subr.bf16.mxu0 0
    %1004 = vmatpush1.bf16.msra.mxu0 0
    %1005 = vmatprep.subr.bf16.mxu0 0
    %1006 = vmatpush1.bf16.msra.mxu0 0
    %1007 = vmatprep.subr.bf16.mxu0 0
    %1008 = vmatpush1.bf16.msra.mxu0 0
    %1009 = vmatprep.subr.bf16.mxu0 0
    %1010 = vmatpush1.bf16.msra.mxu0 0
    %1011 = vmatprep.subr.bf16.mxu0 0
    %1012 = vmatpush1.bf16.msra.mxu0 0
    %1013 = vmatprep.subr.bf16.mxu0 0
    %1014 = vmatpush1.bf16.msra.mxu0 0
    %1015 = vmatprep.subr.bf16.mxu0 0
    %1016 = vmatpush1.bf16.msra.mxu0 0
    %1017 = vmatprep.subr.bf16.mxu0 0
    %1018 = vmatpush1.bf16.msra.mxu0 0
    %1019 = vmatprep.subr.bf16.mxu0 0
    %1020 = vmatpush1.bf16.msra.mxu0 0
    %1021 = vmatprep.subr.bf16.mxu0 0
    %1022 = vmatpush1.bf16.msra.mxu0 0
    %1023 = vmatprep.subr.bf16.mxu0 0
    %1024 = vmatpush1.bf16.msra.mxu0 0
    %1025 = vmatprep.subr.bf16.mxu0 0
    %1026 = vmatpush1.bf16.msra.mxu0 0
    %1027 = vmatprep.subr.bf16.mxu0 0
    %1028 = vmatpush1.bf16.msra.mxu0 0
    %1029 = vmatprep.mubr.bf16.mxu0 0
    %1030 = vmatmul.mubr.bf16.gmra.mrb[0].mxu0 %v995
    %v1031 = vpop.f32.mrb[0].mxu0
    %v1032 = vadd.f32 %v762, %v1031
    %v1033 = vpop.f32.mrb[0].mxu0
    %v1034 = vpop.f32.mrb[0].mxu0
    %v1035 = vpop.f32.mrb[0].mxu0
    %1036 = vdwg.mxu0
    %1037 = vmatprep.subr.bf16.mxu0 0
    %1038 = vmatpush1.bf16.msra.mxu0 %v829
    %1039 = vmatprep.subr.bf16.mxu0 0
    %1040 = vmatpush1.bf16.msra.mxu0 %v830
    %1041 = vmatprep.subr.bf16.mxu0 0
    %1042 = vmatpush1.bf16.msra.mxu0 0
    %1043 = vmatprep.subr.bf16.mxu0 0
    %1044 = vmatpush1.bf16.msra.mxu0 0
    %1045 = vmatprep.subr.bf16.mxu0 0
    %1046 = vmatpush1.bf16.msra.mxu0 0
    %1047 = vmatprep.subr.bf16.mxu0 0
    %1048 = vmatpush1.bf16.msra.mxu0 0
    %1049 = vmatprep.subr.bf16.mxu0 0
    %1050 = vmatpush1.bf16.msra.mxu0 0
    %1051 = vmatprep.subr.bf16.mxu0 0
    %1052 = vmatpush1.bf16.msra.mxu0 0
    %1053 = vmatprep.subr.bf16.mxu0 0
    %1054 = vmatpush1.bf16.msra.mxu0 0
    %1055 = vmatprep.subr.bf16.mxu0 0
    %1056 = vmatpush1.bf16.msra.mxu0 0
    %1057 = vmatprep.subr.bf16.mxu0 0
    %1058 = vmatpush1.bf16.msra.mxu0 0
    %1059 = vmatprep.subr.bf16.mxu0 0
    %1060 = vmatpush1.bf16.msra.mxu0 0
    %1061 = vmatprep.subr.bf16.mxu0 0
    %1062 = vmatpush1.bf16.msra.mxu0 0
    %1063 = vmatprep.subr.bf16.mxu0 0
    %1064 = vmatpush1.bf16.msra.mxu0 0
    %1065 = vmatprep.subr.bf16.mxu0 0
    %1066 = vmatpush1.bf16.msra.mxu0 0
    %1067 = vmatprep.subr.bf16.mxu0 0
    %1068 = vmatpush1.bf16.msra.mxu0 0
    %1069 = vmatprep.mubr.bf16.mxu0 0
    %1070 = vmatmul.mubr.bf16.gmra.mrb[0].mxu0 %v915
    %v1071 = vpop.f32.mrb[0].mxu0
    %v1072 = vadd.f32 0.0, %v1071
    %v1073 = vpop.f32.mrb[0].mxu0
    %v1074 = vpop.f32.mrb[0].mxu0
    %v1075 = vpop.f32.mrb[0].mxu0
    %1076 = vdwg.mxu0
    %v1078 = vrot.slane %v1072, 7
    %v1080 = vadd.f32 %v745, %v1078
    %v1081 = vxor.u32 %v1080, 2147483648
    %v1082 = vmul.f32 %v1081, 1.442695
    %v1083 = vpow.pop %v1082
    %v1084 = vadd.f32 %v1083, 1.0
    %v1085 = vrcp.pop %v1084
    %v1086 = vmul.f32 1.0, %v1085
    %v1087 = vtanh.pop %v1080
    %v1089 = vrot.slane %v891, 7
    %v1091 = vmul.f32 %v1086, %v1089
    %1093 = vrot.lane.b32.xlu0 %v1087, 64
    %v1094 = vpop.permute.xlu0 %1093
    %v1096 = vmul.f32 %v1086, %v1094
    %1098 = vrot.lane.b32.xlu0 %v1096, 32
    %v1099 = vpop.permute.xlu0 %1098
    %v1101 = vadd.f32 %v1091, %v1099
    %v1102 = vtanh.pop %v1101
    %1104 = vrot.lane.b32.xlu0 %v1102, 64
    %v1105 = vpop.permute.xlu0 %1104
    %v1107 = vmul.f32 %v1086, %v1105
    %v1108 = vpack.c.bf16 %v1107, %v1107
    %v1110 = vshrl.u32 %v1108, 16
    %1112 = vrot.lane.b32.xlu0 %v1110, 32
    %v1113 = vpop.permute.xlu0 %1112
    %v1115 = vsel %vm777, %v1113, 0
    %1117 = vmatprep.subr.bf16.mxu0 0
    %1118 = vmatpush1.bf16.msra.mxu0 %v910
    %1119 = vmatprep.subr.bf16.mxu0 0
    %1120 = vmatpush1.bf16.msra.mxu0 %v911
    %1121 = vmatprep.subr.bf16.mxu0 0
    %1122 = vmatpush1.bf16.msra.mxu0 0
    %1123 = vmatprep.subr.bf16.mxu0 0
    %1124 = vmatpush1.bf16.msra.mxu0 0
    %1125 = vmatprep.subr.bf16.mxu0 0
    %1126 = vmatpush1.bf16.msra.mxu0 0
    %1127 = vmatprep.subr.bf16.mxu0 0
    %1128 = vmatpush1.bf16.msra.mxu0 0
    %1129 = vmatprep.subr.bf16.mxu0 0
    %1130 = vmatpush1.bf16.msra.mxu0 0
    %1131 = vmatprep.subr.bf16.mxu0 0
    %1132 = vmatpush1.bf16.msra.mxu0 0
    %1133 = vmatprep.subr.bf16.mxu0 0
    %1134 = vmatpush1.bf16.msra.mxu0 0
    %1135 = vmatprep.subr.bf16.mxu0 0
    %1136 = vmatpush1.bf16.msra.mxu0 0
    %1137 = vmatprep.subr.bf16.mxu0 0
    %1138 = vmatpush1.bf16.msra.mxu0 0
    %1139 = vmatprep.subr.bf16.mxu0 0
    %1140 = vmatpush1.bf16.msra.mxu0 0
    %1141 = vmatprep.subr.bf16.mxu0 0
    %1142 = vmatpush1.bf16.msra.mxu0 0
    %1143 = vmatprep.subr.bf16.mxu0 0
    %1144 = vmatpush1.bf16.msra.mxu0 0
    %1145 = vmatprep.subr.bf16.mxu0 0
    %1146 = vmatpush1.bf16.msra.mxu0 0
    %1147 = vmatprep.subr.bf16.mxu0 0
    %1148 = vmatpush1.bf16.msra.mxu0 0
    %1149 = vmatprep.mubr.bf16.mxu0 0
    %1150 = vmatmul.mubr.bf16.gmra.mrb[0].mxu0 %v1115
    %v1151 = vpop.f32.mrb[0].mxu0
    %v1152 = vadd.f32 %v1032, %v1151
    %v1153 = vpop.f32.mrb[0].mxu0
    %v1154 = vpop.f32.mrb[0].mxu0
    %v1155 = vpop.f32.mrb[0].mxu0
    %1156 = vdwg.mxu0
    %v1157 = vxor.u32 %v1152, 2147483648
    %v1158 = vmul.f32 %v1157, 1.442695
    %v1159 = vpow.pop %v1158
    %v1160 = vadd.f32 %v1159, 1.0
    %v1161 = vrcp.pop %v1160
    %v1162 = vmul.f32 1.0, %v1161
    %v1163 = vtanh.pop %v1152
    %v1164 = vmul.f32 %v1162, %v974
    %1166 = vrot.lane.b32.xlu0 %v1163, 64
    %v1167 = vpop.permute.xlu0 %1166
    %v1169 = vmul.f32 %v1162, %v1167
    %1171 = vrot.lane.b32.xlu0 %v1169, 32
    %v1172 = vpop.permute.xlu0 %1171
    %v1174 = vadd.f32 %v1164, %v1172
    %v1175 = vtanh.pop %v1174
    %1177 = vrot.lane.b32.xlu0 %v1175, 64
    %v1178 = vpop.permute.xlu0 %1177
    %v1180 = vmul.f32 %v1162, %v1178
    %vm1181 = vcmp.eq.s32.totalorder %v764, 1
    %v1182 = vsel %vm1181, 1, 0
    %v1183 = vcvt.s32.f32 %v1182
    %v1184 = vlaneseq
    %v1185 = vshrl.u32 %v1184, 7
    %v1186 = vsub.s32 0, %v1185
    %v1187 = vrot.slane %v1180, %v1186
    %v1188 = vmul.f32 %v1183, %v1187
    %v1189 = vadd.f32 %v989, %v1188
    %v1190 = vpack.c.bf16 %v1180, %v1180
    %1192 = vrot.lane.b32.xlu0 %v1190, 32
    %v1193 = vpop.permute.xlu0 %1192
    %v1195 = vsel %vm777, %v1193, 0
    %1197 = vmatprep.subr.bf16.mxu0 0
    %1198 = vmatpush1.bf16.msra.mxu0 %v773
    %1199 = vmatprep.subr.bf16.mxu0 0
    %1200 = vmatpush1.bf16.msra.mxu0 %v774
    %1201 = vmatprep.subr.bf16.mxu0 0
    %1202 = vmatpush1.bf16.msra.mxu0 0
    %1203 = vmatprep.subr.bf16.mxu0 0
    %1204 = vmatpush1.bf16.msra.mxu0 0
    %1205 = vmatprep.subr.bf16.mxu0 0
    %1206 = vmatpush1.bf16.msra.mxu0 0
    %1207 = vmatprep.subr.bf16.mxu0 0
    %1208 = vmatpush1.bf16.msra.mxu0 0
    %1209 = vmatprep.subr.bf16.mxu0 0
    %1210 = vmatpush1.bf16.msra.mxu0 0
    %1211 = vmatprep.subr.bf16.mxu0 0
    %1212 = vmatpush1.bf16.msra.mxu0 0
    %1213 = vmatprep.subr.bf16.mxu0 0
    %1214 = vmatpush1.bf16.msra.mxu0 0
    %1215 = vmatprep.subr.bf16.mxu0 0
    %1216 = vmatpush1.bf16.msra.mxu0 0
    %1217 = vmatprep.subr.bf16.mxu0 0
    %1218 = vmatpush1.bf16.msra.mxu0 0
    %1219 = vmatprep.subr.bf16.mxu0 0
    %1220 = vmatpush1.bf16.msra.mxu0 0
    %1221 = vmatprep.subr.bf16.mxu0 0
    %1222 = vmatpush1.bf16.msra.mxu0 0
    %1223 = vmatprep.subr.bf16.mxu0 0
    %1224 = vmatpush1.bf16.msra.mxu0 0
    %1225 = vmatprep.subr.bf16.mxu0 0
    %1226 = vmatpush1.bf16.msra.mxu0 0
    %1227 = vmatprep.subr.bf16.mxu0 0
    %1228 = vmatpush1.bf16.msra.mxu0 0
    %1229 = vmatprep.mubr.bf16.mxu0 0
    %1230 = vmatmul.mubr.bf16.gmra.mrb[0].mxu0 %v1195
    %v1231 = vpop.f32.mrb[0].mxu0
    %v1232 = vadd.f32 %v762, %v1231
    %v1233 = vpop.f32.mrb[0].mxu0
    %v1234 = vpop.f32.mrb[0].mxu0
    %v1235 = vpop.f32.mrb[0].mxu0
    %1236 = vdwg.mxu0
    %1237 = vmatprep.subr.bf16.mxu0 0
    %1238 = vmatpush1.bf16.msra.mxu0 %v829
    %1239 = vmatprep.subr.bf16.mxu0 0
    %1240 = vmatpush1.bf16.msra.mxu0 %v830
    %1241 = vmatprep.subr.bf16.mxu0 0
    %1242 = vmatpush1.bf16.msra.mxu0 0
    %1243 = vmatprep.subr.bf16.mxu0 0
    %1244 = vmatpush1.bf16.msra.mxu0 0
    %1245 = vmatprep.subr.bf16.mxu0 0
    %1246 = vmatpush1.bf16.msra.mxu0 0
    %1247 = vmatprep.subr.bf16.mxu0 0
    %1248 = vmatpush1.bf16.msra.mxu0 0
    %1249 = vmatprep.subr.bf16.mxu0 0
    %1250 = vmatpush1.bf16.msra.mxu0 0
    %1251 = vmatprep.subr.bf16.mxu0 0
    %1252 = vmatpush1.bf16.msra.mxu0 0
    %1253 = vmatprep.subr.bf16.mxu0 0
    %1254 = vmatpush1.bf16.msra.mxu0 0
    %1255 = vmatprep.subr.bf16.mxu0 0
    %1256 = vmatpush1.bf16.msra.mxu0 0
    %1257 = vmatprep.subr.bf16.mxu0 0
    %1258 = vmatpush1.bf16.msra.mxu0 0
    %1259 = vmatprep.subr.bf16.mxu0 0
    %1260 = vmatpush1.bf16.msra.mxu0 0
    %1261 = vmatprep.subr.bf16.mxu0 0
    %1262 = vmatpush1.bf16.msra.mxu0 0
    %1263 = vmatprep.subr.bf16.mxu0 0
    %1264 = vmatpush1.bf16.msra.mxu0 0
    %1265 = vmatprep.subr.bf16.mxu0 0
    %1266 = vmatpush1.bf16.msra.mxu0 0
    %1267 = vmatprep.subr.bf16.mxu0 0
    %1268 = vmatpush1.bf16.msra.mxu0 0
    %1269 = vmatprep.mubr.bf16.mxu0 0
    %1270 = vmatmul.mubr.bf16.gmra.mrb[0].mxu0 %v1115
    %v1271 = vpop.f32.mrb[0].mxu0
    %v1272 = vadd.f32 0.0, %v1271
    %v1273 = vpop.f32.mrb[0].mxu0
    %v1274 = vpop.f32.mrb[0].mxu0
    %v1275 = vpop.f32.mrb[0].mxu0
    %1276 = vdwg.mxu0
    %v1278 = vrot.slane %v1272, 6
    %v1280 = vadd.f32 %v745, %v1278
    %v1281 = vxor.u32 %v1280, 2147483648
    %v1282 = vmul.f32 %v1281, 1.442695
    %v1283 = vpow.pop %v1282
    %v1284 = vadd.f32 %v1283, 1.0
    %v1285 = vrcp.pop %v1284
    %v1286 = vmul.f32 1.0, %v1285
    %v1287 = vtanh.pop %v1280
    %v1289 = vrot.slane %v1101, 7
    %v1291 = vmul.f32 %v1286, %v1289
    %1293 = vrot.lane.b32.xlu0 %v1287, 64
    %v1294 = vpop.permute.xlu0 %1293
    %v1296 = vmul.f32 %v1286, %v1294
    %1298 = vrot.lane.b32.xlu0 %v1296, 32
    %v1299 = vpop.permute.xlu0 %1298
    %v1301 = vadd.f32 %v1291, %v1299
    %v1302 = vtanh.pop %v1301
    %1304 = vrot.lane.b32.xlu0 %v1302, 64
    %v1305 = vpop.permute.xlu0 %1304
    %v1307 = vmul.f32 %v1286, %v1305
    %v1308 = vpack.c.bf16 %v1307, %v1307
    %v1310 = vrot.slane %v1308, 1
    %1311 = vrot.lane.b32.xlu0 %v1310, 32
    %v1312 = vpop.permute.xlu0 %1311
    %v1314 = vsel %vm777, %v1312, 0
    %1316 = vmatprep.subr.bf16.mxu0 0
    %1317 = vmatpush1.bf16.msra.mxu0 %v910
    %1318 = vmatprep.subr.bf16.mxu0 0
    %1319 = vmatpush1.bf16.msra.mxu0 %v911
    %1320 = vmatprep.subr.bf16.mxu0 0
    %1321 = vmatpush1.bf16.msra.mxu0 0
    %1322 = vmatprep.subr.bf16.mxu0 0
    %1323 = vmatpush1.bf16.msra.mxu0 0
    %1324 = vmatprep.subr.bf16.mxu0 0
    %1325 = vmatpush1.bf16.msra.mxu0 0
    %1326 = vmatprep.subr.bf16.mxu0 0
    %1327 = vmatpush1.bf16.msra.mxu0 0
    %1328 = vmatprep.subr.bf16.mxu0 0
    %1329 = vmatpush1.bf16.msra.mxu0 0
    %1330 = vmatprep.subr.bf16.mxu0 0
    %1331 = vmatpush1.bf16.msra.mxu0 0
    %1332 = vmatprep.subr.bf16.mxu0 0
    %1333 = vmatpush1.bf16.msra.mxu0 0
    %1334 = vmatprep.subr.bf16.mxu0 0
    %1335 = vmatpush1.bf16.msra.mxu0 0
    %1336 = vmatprep.subr.bf16.mxu0 0
    %1337 = vmatpush1.bf16.msra.mxu0 0
    %1338 = vmatprep.subr.bf16.mxu0 0
    %1339 = vmatpush1.bf16.msra.mxu0 0
    %1340 = vmatprep.subr.bf16.mxu0 0
    %1341 = vmatpush1.bf16.msra.mxu0 0
    %1342 = vmatprep.subr.bf16.mxu0 0
    %1343 = vmatpush1.bf16.msra.mxu0 0
    %1344 = vmatprep.subr.bf16.mxu0 0
    %1345 = vmatpush1.bf16.msra.mxu0 0
    %1346 = vmatprep.subr.bf16.mxu0 0
    %1347 = vmatpush1.bf16.msra.mxu0 0
    %1348 = vmatprep.mubr.bf16.mxu0 0
    %1349 = vmatmul.mubr.bf16.gmra.mrb[0].mxu0 %v1314
    %v1350 = vpop.f32.mrb[0].mxu0
    %v1351 = vadd.f32 %v1232, %v1350
    %v1352 = vpop.f32.mrb[0].mxu0
    %v1353 = vpop.f32.mrb[0].mxu0
    %v1354 = vpop.f32.mrb[0].mxu0
    %1355 = vdwg.mxu0
    %v1356 = vxor.u32 %v1351, 2147483648
    %v1357 = vmul.f32 %v1356, 1.442695
    %v1358 = vpow.pop %v1357
    %v1359 = vadd.f32 %v1358, 1.0
    %v1360 = vrcp.pop %v1359
    %v1361 = vmul.f32 1.0, %v1360
    %v1362 = vtanh.pop %v1351
    %v1363 = vmul.f32 %v1361, %v1174
    %1365 = vrot.lane.b32.xlu0 %v1362, 64
    %v1366 = vpop.permute.xlu0 %1365
    %v1368 = vmul.f32 %v1361, %v1366
    %1370 = vrot.lane.b32.xlu0 %v1368, 32
    %v1371 = vpop.permute.xlu0 %1370
    %v1373 = vadd.f32 %v1363, %v1371
    %v1374 = vtanh.pop %v1373
    %1376 = vrot.lane.b32.xlu0 %v1374, 64
    %v1377 = vpop.permute.xlu0 %1376
    %v1379 = vmul.f32 %v1361, %v1377
    %vm1380 = vcmp.eq.s32.totalorder %v764, 2
    %v1381 = vsel %vm1380, 1, 0
    %v1382 = vcvt.s32.f32 %v1381
    %v1383 = vlaneseq
    %v1384 = vshrl.u32 %v1383, 7
    %v1385 = vsub.s32 0, %v1384
    %v1386 = vrot.slane %v1379, %v1385
    %v1387 = vmul.f32 %v1382, %v1386
    %v1388 = vadd.f32 %v1189, %v1387
    %v1389 = vpack.c.bf16 %v1379, %v1379
    %1391 = vrot.lane.b32.xlu0 %v1389, 32
    %v1392 = vpop.permute.xlu0 %1391
    %v1394 = vsel %vm777, %v1392, 0
    %1396 = vmatprep.subr.bf16.mxu0 0
    %1397 = vmatpush1.bf16.msra.mxu0 %v773
    %1398 = vmatprep.subr.bf16.mxu0 0
    %1399 = vmatpush1.bf16.msra.mxu0 %v774
    %1400 = vmatprep.subr.bf16.mxu0 0
    %1401 = vmatpush1.bf16.msra.mxu0 0
    %1402 = vmatprep.subr.bf16.mxu0 0
    %1403 = vmatpush1.bf16.msra.mxu0 0
    %1404 = vmatprep.subr.bf16.mxu0 0
    %1405 = vmatpush1.bf16.msra.mxu0 0
    %1406 = vmatprep.subr.bf16.mxu0 0
    %1407 = vmatpush1.bf16.msra.mxu0 0
    %1408 = vmatprep.subr.bf16.mxu0 0
    %1409 = vmatpush1.bf16.msra.mxu0 0
    %1410 = vmatprep.subr.bf16.mxu0 0
    %1411 = vmatpush1.bf16.msra.mxu0 0
    %1412 = vmatprep.subr.bf16.mxu0 0
    %1413 = vmatpush1.bf16.msra.mxu0 0
    %1414 = vmatprep.subr.bf16.mxu0 0
    %1415 = vmatpush1.bf16.msra.mxu0 0
    %1416 = vmatprep.subr.bf16.mxu0 0
    %1417 = vmatpush1.bf16.msra.mxu0 0
    %1418 = vmatprep.subr.bf16.mxu0 0
    %1419 = vmatpush1.bf16.msra.mxu0 0
    %1420 = vmatprep.subr.bf16.mxu0 0
    %1421 = vmatpush1.bf16.msra.mxu0 0
    %1422 = vmatprep.subr.bf16.mxu0 0
    %1423 = vmatpush1.bf16.msra.mxu0 0
    %1424 = vmatprep.subr.bf16.mxu0 0
    %1425 = vmatpush1.bf16.msra.mxu0 0
    %1426 = vmatprep.subr.bf16.mxu0 0
    %1427 = vmatpush1.bf16.msra.mxu0 0
    %1428 = vmatprep.mubr.bf16.mxu0 0
    %1429 = vmatmul.mubr.bf16.gmra.mrb[0].mxu0 %v1394
    %v1430 = vpop.f32.mrb[0].mxu0
    %v1431 = vadd.f32 %v762, %v1430
    %v1432 = vpop.f32.mrb[0].mxu0
    %v1433 = vpop.f32.mrb[0].mxu0
    %v1434 = vpop.f32.mrb[0].mxu0
    %1435 = vdwg.mxu0
    %1436 = vmatprep.subr.bf16.mxu0 0
    %1437 = vmatpush1.bf16.msra.mxu0 %v829
    %1438 = vmatprep.subr.bf16.mxu0 0
    %1439 = vmatpush1.bf16.msra.mxu0 %v830
    %1440 = vmatprep.subr.bf16.mxu0 0
    %1441 = vmatpush1.bf16.msra.mxu0 0
    %1442 = vmatprep.subr.bf16.mxu0 0
    %1443 = vmatpush1.bf16.msra.mxu0 0
    %1444 = vmatprep.subr.bf16.mxu0 0
    %1445 = vmatpush1.bf16.msra.mxu0 0
    %1446 = vmatprep.subr.bf16.mxu0 0
    %1447 = vmatpush1.bf16.msra.mxu0 0
    %1448 = vmatprep.subr.bf16.mxu0 0
    %1449 = vmatpush1.bf16.msra.mxu0 0
    %1450 = vmatprep.subr.bf16.mxu0 0
    %1451 = vmatpush1.bf16.msra.mxu0 0
    %1452 = vmatprep.subr.bf16.mxu0 0
    %1453 = vmatpush1.bf16.msra.mxu0 0
    %1454 = vmatprep.subr.bf16.mxu0 0
    %1455 = vmatpush1.bf16.msra.mxu0 0
    %1456 = vmatprep.subr.bf16.mxu0 0
    %1457 = vmatpush1.bf16.msra.mxu0 0
    %1458 = vmatprep.subr.bf16.mxu0 0
    %1459 = vmatpush1.bf16.msra.mxu0 0
    %1460 = vmatprep.subr.bf16.mxu0 0
    %1461 = vmatpush1.bf16.msra.mxu0 0
    %1462 = vmatprep.subr.bf16.mxu0 0
    %1463 = vmatpush1.bf16.msra.mxu0 0
    %1464 = vmatprep.subr.bf16.mxu0 0
    %1465 = vmatpush1.bf16.msra.mxu0 0
    %1466 = vmatprep.subr.bf16.mxu0 0
    %1467 = vmatpush1.bf16.msra.mxu0 0
    %1468 = vmatprep.mubr.bf16.mxu0 0
    %1469 = vmatmul.mubr.bf16.gmra.mrb[0].mxu0 %v1314
    %v1470 = vpop.f32.mrb[0].mxu0
    %v1471 = vadd.f32 0.0, %v1470
    %v1472 = vpop.f32.mrb[0].mxu0
    %v1473 = vpop.f32.mrb[0].mxu0
    %v1474 = vpop.f32.mrb[0].mxu0
    %1475 = vdwg.mxu0
    %v1477 = vrot.slane %v1471, 5
    %v1479 = vadd.f32 %v745, %v1477
    %v1480 = vxor.u32 %v1479, 2147483648
    %v1481 = vmul.f32 %v1480, 1.442695
    %v1482 = vpow.pop %v1481
    %v1483 = vadd.f32 %v1482, 1.0
    %v1484 = vrcp.pop %v1483
    %v1485 = vmul.f32 1.0, %v1484
    %v1486 = vtanh.pop %v1479
    %v1488 = vrot.slane %v1301, 7
    %v1490 = vmul.f32 %v1485, %v1488
    %1492 = vrot.lane.b32.xlu0 %v1486, 64
    %v1493 = vpop.permute.xlu0 %1492
    %v1495 = vmul.f32 %v1485, %v1493
    %1497 = vrot.lane.b32.xlu0 %v1495, 32
    %v1498 = vpop.permute.xlu0 %1497
    %v1500 = vadd.f32 %v1490, %v1498
    %v1501 = vtanh.pop %v1500
    %1503 = vrot.lane.b32.xlu0 %v1501, 64
    %v1504 = vpop.permute.xlu0 %1503
    %v1506 = vmul.f32 %v1485, %v1504
    %v1507 = vpack.c.bf16 %v1506, %v1506
    %v1509 = vshrl.u32 %v1507, 16
    %v1511 = vrot.slane %v1509, 1
    %1512 = vrot.lane.b32.xlu0 %v1511, 32
    %v1513 = vpop.permute.xlu0 %1512
    %v1515 = vsel %vm777, %v1513, 0
    %1517 = vmatprep.subr.bf16.mxu0 0
    %1518 = vmatpush1.bf16.msra.mxu0 %v910
    %1519 = vmatprep.subr.bf16.mxu0 0
    %1520 = vmatpush1.bf16.msra.mxu0 %v911
    %1521 = vmatprep.subr.bf16.mxu0 0
    %1522 = vmatpush1.bf16.msra.mxu0 0
    %1523 = vmatprep.subr.bf16.mxu0 0
    %1524 = vmatpush1.bf16.msra.mxu0 0
    %1525 = vmatprep.subr.bf16.mxu0 0
    %1526 = vmatpush1.bf16.msra.mxu0 0
    %1527 = vmatprep.subr.bf16.mxu0 0
    %1528 = vmatpush1.bf16.msra.mxu0 0
    %1529 = vmatprep.subr.bf16.mxu0 0
    %1530 = vmatpush1.bf16.msra.mxu0 0
    %1531 = vmatprep.subr.bf16.mxu0 0
    %1532 = vmatpush1.bf16.msra.mxu0 0
    %1533 = vmatprep.subr.bf16.mxu0 0
    %1534 = vmatpush1.bf16.msra.mxu0 0
    %1535 = vmatprep.subr.bf16.mxu0 0
    %1536 = vmatpush1.bf16.msra.mxu0 0
    %1537 = vmatprep.subr.bf16.mxu0 0
    %1538 = vmatpush1.bf16.msra.mxu0 0
    %1539 = vmatprep.subr.bf16.mxu0 0
    %1540 = vmatpush1.bf16.msra.mxu0 0
    %1541 = vmatprep.subr.bf16.mxu0 0
    %1542 = vmatpush1.bf16.msra.mxu0 0
    %1543 = vmatprep.subr.bf16.mxu0 0
    %1544 = vmatpush1.bf16.msra.mxu0 0
    %1545 = vmatprep.subr.bf16.mxu0 0
    %1546 = vmatpush1.bf16.msra.mxu0 0
    %1547 = vmatprep.subr.bf16.mxu0 0
    %1548 = vmatpush1.bf16.msra.mxu0 0
    %1549 = vmatprep.mubr.bf16.mxu0 0
    %1550 = vmatmul.mubr.bf16.gmra.mrb[0].mxu0 %v1515
    %v1551 = vpop.f32.mrb[0].mxu0
    %v1552 = vadd.f32 %v1431, %v1551
    %v1553 = vpop.f32.mrb[0].mxu0
    %v1554 = vpop.f32.mrb[0].mxu0
    %v1555 = vpop.f32.mrb[0].mxu0
    %1556 = vdwg.mxu0
    %v1557 = vxor.u32 %v1552, 2147483648
    %v1558 = vmul.f32 %v1557, 1.442695
    %v1559 = vpow.pop %v1558
    %v1560 = vadd.f32 %v1559, 1.0
    %v1561 = vrcp.pop %v1560
    %v1562 = vmul.f32 1.0, %v1561
    %v1563 = vtanh.pop %v1552
    %v1564 = vmul.f32 %v1562, %v1373
    %1566 = vrot.lane.b32.xlu0 %v1563, 64
    %v1567 = vpop.permute.xlu0 %1566
    %v1569 = vmul.f32 %v1562, %v1567
    %1571 = vrot.lane.b32.xlu0 %v1569, 32
    %v1572 = vpop.permute.xlu0 %1571
    %v1574 = vadd.f32 %v1564, %v1572
    %v1575 = vtanh.pop %v1574
    %1577 = vrot.lane.b32.xlu0 %v1575, 64
    %v1578 = vpop.permute.xlu0 %1577
    %v1580 = vmul.f32 %v1562, %v1578
    %vm1581 = vcmp.eq.s32.totalorder %v764, 3
    %v1582 = vsel %vm1581, 1, 0
    %v1583 = vcvt.s32.f32 %v1582
    %v1584 = vlaneseq
    %v1585 = vshrl.u32 %v1584, 7
    %v1586 = vsub.s32 0, %v1585
    %v1587 = vrot.slane %v1580, %v1586
    %v1588 = vmul.f32 %v1583, %v1587
    %v1589 = vadd.f32 %v1388, %v1588
    %v1590 = vpack.c.bf16 %v1589, %v1589
    %v1591 = vld [vmem:[%s12] sm:$0xf]
    %v1592 = vld [vmem:[%s12 + $0x4] sm:$0xf]
    %v1593 = vld [vmem:[%s12 + $0x8] sm:$0xf]
    %v1594 = vld [vmem:[%s12 + $0xc] sm:$0xf]
    %v1595 = vld [vmem:[%s13] sm:$0x1]
    %v1597 = vlaneseq
    %v1598 = vshrl.u32 %v1597, 7
    %v1599 = vsub.s32 0, %v1598
    %v1600 = vrot.slane %v1595, %v1599
    %1603 = vrot.lane.b32.xlu0 %v1590, 32
    %v1604 = vpop.permute.xlu0 %1603
    %v1609 = vunpack.c.l.b16 %v1591
    %v1610 = vunpack.c.l.b16 %v1592
    %v1611 = vunpack.c.l.b16 %v1593
    %v1612 = vunpack.c.l.b16 %v1594
    %v1613 = vpack.c.b16 %v1610, %v1609
    %v1614 = vpack.c.b16 %v1612, %v1611
    %v1618 = vsel %vm777, %v1604, 0
    %1620 = vmatprep.subr.bf16.mxu0 0
    %1621 = vmatpush1.bf16.msra.mxu0 %v1613
    %1622 = vmatprep.subr.bf16.mxu0 0
    %1623 = vmatpush1.bf16.msra.mxu0 %v1614
    %1624 = vmatprep.subr.bf16.mxu0 0
    %1625 = vmatpush1.bf16.msra.mxu0 0
    %1626 = vmatprep.subr.bf16.mxu0 0
    %1627 = vmatpush1.bf16.msra.mxu0 0
    %1628 = vmatprep.subr.bf16.mxu0 0
    %1629 = vmatpush1.bf16.msra.mxu0 0
    %1630 = vmatprep.subr.bf16.mxu0 0
    %1631 = vmatpush1.bf16.msra.mxu0 0
    %1632 = vmatprep.subr.bf16.mxu0 0
    %1633 = vmatpush1.bf16.msra.mxu0 0
    %1634 = vmatprep.subr.bf16.mxu0 0
    %1635 = vmatpush1.bf16.msra.mxu0 0
    %1636 = vmatprep.subr.bf16.mxu0 0
    %1637 = vmatpush1.bf16.msra.mxu0 0
    %1638 = vmatprep.subr.bf16.mxu0 0
    %1639 = vmatpush1.bf16.msra.mxu0 0
    %1640 = vmatprep.subr.bf16.mxu0 0
    %1641 = vmatpush1.bf16.msra.mxu0 0
    %1642 = vmatprep.subr.bf16.mxu0 0
    %1643 = vmatpush1.bf16.msra.mxu0 0
    %1644 = vmatprep.subr.bf16.mxu0 0
    %1645 = vmatpush1.bf16.msra.mxu0 0
    %1646 = vmatprep.subr.bf16.mxu0 0
    %1647 = vmatpush1.bf16.msra.mxu0 0
    %1648 = vmatprep.subr.bf16.mxu0 0
    %1649 = vmatpush1.bf16.msra.mxu0 0
    %1650 = vmatprep.subr.bf16.mxu0 0
    %1651 = vmatpush1.bf16.msra.mxu0 0
    %1652 = vmatprep.mubr.bf16.mxu0 0
    %1653 = vmatmul.mubr.bf16.gmra.mrb[0].mxu0 %v1618
    %v1654 = vpop.f32.mrb[0].mxu0
    %v1655 = vadd.f32 %v1600, %v1654
    %v1656 = vpop.f32.mrb[0].mxu0
    %v1657 = vpop.f32.mrb[0].mxu0
    %v1658 = vpop.f32.mrb[0].mxu0
    %1659 = vdwg.mxu0
    %vm1660 = vcmask 60416
    %1661 = vst.msk [vmem:[#allocation3] sm:$0xf] %vm1660, %v1655
    // Predicated region
    $region58: #{cnn_lstm_forward.1} parent=1 // pred_check
      _
    $region59: #{cnn_lstm_forward.1} parent=1 // pred_check_branch
      %1663 = sbr.rel (0) target = $region61
    $region60: #{cnn_lstm_forward.1} parent=1 // pred_region
      %s1665 = ssub.s32 64, 64
      %1666 = vsyncadd [#allocation4], %s1665
      %s1668 = sshll.u32 [#allocation3], 4
      %s1669 = int_to_ptr.vmem [resolvable:$true] %s1668
      %1671 = dma.vmem_to_hbm [thread:$0]  %s1669, 64, %s14, [#allocation4]
    $region61: #{cnn_lstm_forward.1} parent=1 // pred_fallthru
      _
    // Predicated region
    $region62: #{cnn_lstm_forward.1} parent=1 // pred_check
      _
    $region63: #{cnn_lstm_forward.1} parent=1 // pred_check_branch
      %1673 = sbr.rel (0) target = $region65
    $region64: #{cnn_lstm_forward.1} parent=1 // pred_region
      %1674 = dma.done [#allocation4], 64
    $region65: #{cnn_lstm_forward.1} parent=1 // pred_fallthru
      _
    %1675 = vsyncpa [#allocation4], 1

</llo_original>
